<compile_context>
chip_gen: v7x
topology: tpu7x:2x2x1
jax: 0.10.0
libtpu: 0.0.40
codegen_flags: <defaults>
</compile_context>

<pallas_src>
import jax
import jax.numpy as jnp
import numpy as np
from jax.experimental import pallas as pl
from jax.experimental.pallas import tpu as pltpu

# --- config (embed_dim=32, num_heads=4, ff_dim=64, bias=True, non_linearity=ReLU) ---
EMBED_DIM = 32
NUM_HEADS = 4
HEAD_DIM = EMBED_DIM // NUM_HEADS   # 8
FF_DIM = 64
LN_EPS = 1e-5
SLAB_LANES = 128

# --- dense parameter-slab layout (rows x 128 lanes, f32) ---
_R_WQKV = 0                          # rows   0:32 , lanes 0:96   = [Wq*s | Wk | Wv]
_R_WO = 0                            # rows   0:32 , lanes 96:128 = Wo
_R_W1 = EMBED_DIM                    # rows  32:64 , lanes 0:64   = W1
_R_W2 = 2 * EMBED_DIM                # rows  64:128, lanes 0:32   = W2
_R_VEC = 2 * EMBED_DIM + FF_DIM      # rows 128:136, one vector per row
(_V_BQKV, _V_BO, _V_B1, _V_B2,
 _V_LN1G, _V_LN1B, _V_LN2G, _V_LN2B) = range(8)
SLAB_ROWS = _R_VEC + 8               # 136


def make_kernel(Lq: int, Lk: int):
    """Build the fused MHA-block kernel for static sequence lengths Lq / Lk(=Lv)."""
    E, F, H, Dh = EMBED_DIM, FF_DIM, NUM_HEADS, HEAD_DIM
    LTOT = Lq + 2 * Lk

    def kernel(act_ref, slab_ref, out_ref):
        f32 = jnp.float32

        def vec(i, width):
            r = _R_VEC + i
            return slab_ref[r:r + 1, 0:width]        # (1, width) static slice

        acts = act_ref[...]                          # (LTOT, E) = [q; k; v]

        # ---- fused QKV in-projection: one (LTOT,E) x (E,3E) matmul ----
        wqkv = slab_ref[_R_WQKV:_R_WQKV + E, 0:3 * E]
        proj = jnp.dot(acts, wqkv, preferred_element_type=f32) + vec(_V_BQKV, 3 * E)
        qp = proj[0:Lq, 0:E]                         # q rows, Wq*scale columns (+bq*scale)
        kp = proj[Lq:Lq + Lk, E:2 * E]               # k rows, Wk columns (+bk)
        vp = proj[Lq + Lk:LTOT, 2 * E:3 * E]         # v rows, Wv columns (+bv)

        # ---- per-head scores, softmax batched across heads ----
        scores = [
            jax.lax.dot_general(qp[:, h * Dh:(h + 1) * Dh], kp[:, h * Dh:(h + 1) * Dh],
                                (((1,), (1,)), ((), ())), preferred_element_type=f32)
            for h in range(H)
        ]
        s_all = jnp.concatenate(scores, axis=0)      # (H*Lq, Lk), sublane-stacked
        m = jnp.max(s_all, axis=-1, keepdims=True)
        e = jnp.exp(s_all - m)
        p_all = e * pl.reciprocal(jnp.sum(e, axis=-1, keepdims=True), approx=False)

        # ---- per-head context, then ONE full out-projection matmul ----
        ctxs = [
            jnp.dot(p_all[h * Lq:(h + 1) * Lq, :], vp[:, h * Dh:(h + 1) * Dh],
                    preferred_element_type=f32)
            for h in range(H)
        ]
        ctx = jnp.concatenate(ctxs, axis=1)          # (Lq, E) == concat over heads
        wo = slab_ref[_R_WO:_R_WO + E, 3 * E:4 * E]
        attn = jnp.dot(ctx, wo, preferred_element_type=f32) + vec(_V_BO, E)

        # ---- residual + LayerNorm 1 ----
        x = attn + acts[0:Lq, :]
        mu = jnp.mean(x, axis=-1, keepdims=True)
        xc = x - mu
        var = jnp.mean(xc * xc, axis=-1, keepdims=True)
        x = xc * jax.lax.rsqrt(var + LN_EPS) * vec(_V_LN1G, E) + vec(_V_LN1B, E)

        # ---- feedforward: Linear -> ReLU -> Linear ----
        w1 = slab_ref[_R_W1:_R_W1 + E, 0:F]
        w2 = slab_ref[_R_W2:_R_W2 + F, 0:E]
        h1 = jnp.maximum(jnp.dot(x, w1, preferred_element_type=f32) + vec(_V_B1, F), 0.0)
        ff = jnp.dot(h1, w2, preferred_element_type=f32) + vec(_V_B2, E)

        # ---- residual + LayerNorm 2 ----
        y = x + ff
        mu2 = jnp.mean(y, axis=-1, keepdims=True)
        yc = y - mu2
        var2 = jnp.mean(yc * yc, axis=-1, keepdims=True)
        out_ref[...] = yc * jax.lax.rsqrt(var2 + LN_EPS) * vec(_V_LN2G, E) + vec(_V_LN2B, E)

    return kernel


def init_params(key):
    """Deterministic uniform(-1/sqrt(in), 1/sqrt(in)) init; weights stored (in, out)."""
    ks = jax.random.split(key, 12)

    def u(kk, shape, fan_in):
        b = 1.0 / np.sqrt(fan_in)
        return jax.random.uniform(kk, shape, jnp.float32, -b, b)

    E, F = EMBED_DIM, FF_DIM
    return dict(
        wq=u(ks[0], (E, E), E), bq=u(ks[1], (E,), E),
        wk=u(ks[2], (E, E), E), bk=u(ks[3], (E,), E),
        wv=u(ks[4], (E, E), E), bv=u(ks[5], (E,), E),
        wo=u(ks[6], (E, E), E), bo=u(ks[7], (E,), E),
        w1=u(ks[8], (E, F), E), b1=u(ks[9], (F,), E),
        w2=u(ks[10], (F, E), F), b2=u(ks[11], (E,), F),
        ln1_g=jnp.ones((E,), jnp.float32), ln1_b=jnp.zeros((E,), jnp.float32),
        ln2_g=jnp.ones((E,), jnp.float32), ln2_b=jnp.zeros((E,), jnp.float32),
    )


def pack_params(params):
    """Pack all 16 parameter tensors into one dense (136,128) f32 slab (single DMA).
    The attention q-scale 1/sqrt(head_dim) is folded into Wq/bq here."""
    E, F = EMBED_DIM, FF_DIM
    scale = 1.0 / np.sqrt(HEAD_DIM)
    p = {k: np.asarray(v, np.float32) for k, v in params.items()}

    slab = np.zeros((SLAB_ROWS, SLAB_LANES), np.float32)
    # weights
    slab[_R_WQKV:_R_WQKV + E, 0:E] = p["wq"] * scale
    slab[_R_WQKV:_R_WQKV + E, E:2 * E] = p["wk"]
    slab[_R_WQKV:_R_WQKV + E, 2 * E:3 * E] = p["wv"]
    slab[_R_WO:_R_WO + E, 3 * E:4 * E] = p["wo"]
    slab[_R_W1:_R_W1 + E, 0:F] = p["w1"]
    slab[_R_W2:_R_W2 + F, 0:E] = p["w2"]
    # bias / LayerNorm vectors (one per row)
    slab[_R_VEC + _V_BQKV, 0:E] = p["bq"] * scale
    slab[_R_VEC + _V_BQKV, E:2 * E] = p["bk"]
    slab[_R_VEC + _V_BQKV, 2 * E:3 * E] = p["bv"]
    slab[_R_VEC + _V_BO, 0:E] = p["bo"]
    slab[_R_VEC + _V_B1, 0:F] = p["b1"]
    slab[_R_VEC + _V_B2, 0:E] = p["b2"]
    slab[_R_VEC + _V_LN1G, 0:E] = p["ln1_g"]
    slab[_R_VEC + _V_LN1B, 0:E] = p["ln1_b"]
    slab[_R_VEC + _V_LN2G, 0:E] = p["ln2_g"]
    slab[_R_VEC + _V_LN2B, 0:E] = p["ln2_b"]
    return jnp.asarray(slab)


def mha_forward(q, k, v, slab):
    """Forward. Accepts (L, E) unbatched inputs (module signature) or (B, L, E) batched."""
    squeeze = q.ndim == 2
    if squeeze:
        q, k, v = q[None], k[None], v[None]
    B, Lq, _ = q.shape
    Lk = k.shape[1]
    LTOT = Lq + 2 * Lk

    # one activation slab per sample: [q; k; v] row-stacked -> single input DMA per step
    act = jnp.concatenate([q, k, v], axis=1)         # (B, LTOT, E)

    out = pl.pallas_call(
        make_kernel(Lq, Lk),
        out_shape=jax.ShapeDtypeStruct((B, Lq, EMBED_DIM), jnp.float32),
        grid=(B,),
        in_specs=[
            pl.BlockSpec((None, LTOT, EMBED_DIM), lambda b: (b, 0, 0)),
            pl.BlockSpec((SLAB_ROWS, SLAB_LANES), lambda b: (0, 0)),   # resident params
        ],
        out_specs=pl.BlockSpec((None, Lq, EMBED_DIM), lambda b: (b, 0, 0)),
        compiler_params=pltpu.CompilerParams(dimension_semantics=("parallel",)),
    )(act, slab)
    return out[0] if squeeze else out


# ------------------------- pure-JAX reference -------------------------
def _layer_norm_ref(x, g, b):
    mu = jnp.mean(x, axis=-1, keepdims=True)
    xc = x - mu
    var = jnp.mean(xc * xc, axis=-1, keepdims=True)
    return xc * jax.lax.rsqrt(var + LN_EPS) * g + b


def mha_reference(q, k, v, params):
    """Pure-JAX reference mirroring the PyTorch MHA forward (unfolded scale)."""
    scale = 1.0 / np.sqrt(HEAD_DIM)
    qp = (q @ params["wq"] + params["bq"]) * scale
    kp = k @ params["wk"] + params["bk"]
    vp = v @ params["wv"] + params["bv"]
    Lq, Lk = q.shape[0], k.shape[0]
    qh = qp.reshape(Lq, NUM_HEADS, HEAD_DIM).transpose(1, 0, 2)
    kh = kp.reshape(Lk, NUM_HEADS, HEAD_DIM).transpose(1, 0, 2)
    vh = vp.reshape(Lk, NUM_HEADS, HEAD_DIM).transpose(1, 0, 2)
    s = jnp.einsum("hqd,hkd->hqk", qh, kh)
    p = jax.nn.softmax(s, axis=-1)
    ctx = jnp.einsum("hqk,hkd->hqd", p, vh).transpose(1, 0, 2).reshape(Lq, EMBED_DIM)
    attn = ctx @ params["wo"] + params["bo"]
    x = _layer_norm_ref(attn + q, params["ln1_g"], params["ln1_b"])
    hmid = jax.nn.relu(x @ params["w1"] + params["b1"])
    ff = hmid @ params["w2"] + params["b2"]
    return _layer_norm_ref(x + ff, params["ln2_g"], params["ln2_b"])


if __name__ == "__main__":
    key = jax.random.PRNGKey(0)
    k_params, kq, kk, kv = jax.random.split(key, 4)

    params = init_params(k_params)
    slab = pack_params(params)

    B, Lq, Lkv = 4, 8, 16
    q = jax.random.normal(kq, (B, Lq, EMBED_DIM), jnp.float32)
    k = jax.random.normal(kk, (B, Lkv, EMBED_DIM), jnp.float32)
    v = jax.random.normal(kv, (B, Lkv, EMBED_DIM), jnp.float32)

    out = jax.block_until_ready(mha_forward(q, k, v, slab))
    assert out.shape == (B, Lq, EMBED_DIM)

    ref = jax.vmap(mha_reference, in_axes=(0, 0, 0, None))(q, k, v, params)
    np.testing.assert_allclose(np.asarray(out), np.asarray(ref), rtol=2e-5, atol=2e-5)

    # also exercise the unbatched 2-D path (the module's forward signature)
    out2 = jax.block_until_ready(mha_forward(q[0], k[0], v[0], slab))
    np.testing.assert_allclose(np.asarray(out2), np.asarray(ref[0]), rtol=2e-5, atol=2e-5)

    print("KERNEL_OK")
</pallas_src>

<mosaic_0001>
module attributes {stable_mosaic.version = 11 : i64} {
  func.func @kernel(%arg0: i32, %arg1: memref<1x40x32xf32, #tpu.memory_space<vmem>>, %arg2: memref<136x128xf32, #tpu.memory_space<vmem>>, %arg3: memref<1x8x32xf32, #tpu.memory_space<vmem>>) attributes {dimension_semantics = [#tpu.dimension_semantics<parallel>], iteration_bounds = array<i64: 4>, scalar_prefetch = 0 : i64, scratch_operands = 0 : i64, tpu.core_type = #tpu.core_type<tc>, window_params = [{transform_indices = @transform_0, window_bounds = array<i64: 1, 40, 32>}, {pipeline_mode = #tpu.pipeline_mode<synchronous>, transform_indices = @transform_1, window_bounds = array<i64: 136, 128>}, {transform_indices = @transform_2, window_bounds = array<i64: 1, 8, 32>}]} {
    %c0 = arith.constant 0 : index
    %c0_0 = arith.constant 0 : index
    %c0_1 = arith.constant 0 : index
    %0 = vector.load %arg1[%c0, %c0_0, %c0_1] : memref<1x40x32xf32, #tpu.memory_space<vmem>>, vector<1x40x32xf32>
    %1 = vector.shape_cast %0 : vector<1x40x32xf32> to vector<40x32xf32>
    %c0_2 = arith.constant 0 : index
    %c0_3 = arith.constant 0 : index
    %2 = vector.load %arg2[%c0_2, %c0_3] : memref<136x128xf32, #tpu.memory_space<vmem>>, vector<32x96xf32>
    %cst = arith.constant dense<0.000000e+00> : vector<40x96xf32>
    %3 = tpu.matmul %1, %2, %cst {dimension_numbers = #tpu.dot_dimension_numbers<[1], [0], [0], [1], [0, 0, 1, 1], [], []>} : vector<40x32xf32>, vector<32x96xf32>, vector<40x96xf32> -> vector<40x96xf32>
    %c128 = arith.constant 128 : index
    %c0_4 = arith.constant 0 : index
    %4 = vector.load %arg2[%c128, %c0_4] : memref<136x128xf32, #tpu.memory_space<vmem>>, vector<1x96xf32>
    %5 = vector.broadcast %4 : vector<1x96xf32> to vector<40x96xf32>
    %6 = arith.addf %3, %5 : vector<40x96xf32>
    %7 = vector.extract_strided_slice %6 {offsets = [0, 0], sizes = [8, 32], strides = [1, 1]} : vector<40x96xf32> to vector<8x32xf32>
    %8 = vector.extract_strided_slice %6 {offsets = [8, 32], sizes = [16, 32], strides = [1, 1]} : vector<40x96xf32> to vector<16x32xf32>
    %9 = vector.extract_strided_slice %6 {offsets = [24, 64], sizes = [16, 32], strides = [1, 1]} : vector<40x96xf32> to vector<16x32xf32>
    %10 = vector.extract_strided_slice %7 {offsets = [0, 0], sizes = [8, 8], strides = [1, 1]} : vector<8x32xf32> to vector<8x8xf32>
    %11 = vector.extract_strided_slice %8 {offsets = [0, 0], sizes = [16, 8], strides = [1, 1]} : vector<16x32xf32> to vector<16x8xf32>
    %cst_5 = arith.constant dense<0.000000e+00> : vector<8x16xf32>
    %12 = tpu.matmul %10, %11, %cst_5 {dimension_numbers = #tpu.dot_dimension_numbers<[1], [1], [0], [0], [0, 0, 1, 0], [], []>} : vector<8x8xf32>, vector<16x8xf32>, vector<8x16xf32> -> vector<8x16xf32>
    %13 = vector.extract_strided_slice %7 {offsets = [0, 8], sizes = [8, 8], strides = [1, 1]} : vector<8x32xf32> to vector<8x8xf32>
    %14 = vector.extract_strided_slice %8 {offsets = [0, 8], sizes = [16, 8], strides = [1, 1]} : vector<16x32xf32> to vector<16x8xf32>
    %cst_6 = arith.constant dense<0.000000e+00> : vector<8x16xf32>
    %15 = tpu.matmul %13, %14, %cst_6 {dimension_numbers = #tpu.dot_dimension_numbers<[1], [1], [0], [0], [0, 0, 1, 0], [], []>} : vector<8x8xf32>, vector<16x8xf32>, vector<8x16xf32> -> vector<8x16xf32>
    %16 = vector.extract_strided_slice %7 {offsets = [0, 16], sizes = [8, 8], strides = [1, 1]} : vector<8x32xf32> to vector<8x8xf32>
    %17 = vector.extract_strided_slice %8 {offsets = [0, 16], sizes = [16, 8], strides = [1, 1]} : vector<16x32xf32> to vector<16x8xf32>
    %cst_7 = arith.constant dense<0.000000e+00> : vector<8x16xf32>
    %18 = tpu.matmul %16, %17, %cst_7 {dimension_numbers = #tpu.dot_dimension_numbers<[1], [1], [0], [0], [0, 0, 1, 0], [], []>} : vector<8x8xf32>, vector<16x8xf32>, vector<8x16xf32> -> vector<8x16xf32>
    %19 = vector.extract_strided_slice %7 {offsets = [0, 24], sizes = [8, 8], strides = [1, 1]} : vector<8x32xf32> to vector<8x8xf32>
    %20 = vector.extract_strided_slice %8 {offsets = [0, 24], sizes = [16, 8], strides = [1, 1]} : vector<16x32xf32> to vector<16x8xf32>
    %cst_8 = arith.constant dense<0.000000e+00> : vector<8x16xf32>
    %21 = tpu.matmul %19, %20, %cst_8 {dimension_numbers = #tpu.dot_dimension_numbers<[1], [1], [0], [0], [0, 0, 1, 0], [], []>} : vector<8x8xf32>, vector<16x8xf32>, vector<8x16xf32> -> vector<8x16xf32>
    %22 = tpu.concatenate %12, %15, %18, %21 in 0 : vector<8x16xf32>, vector<8x16xf32>, vector<8x16xf32>, vector<8x16xf32> -> vector<32x16xf32>
    %cst_9 = arith.constant dense<0xFF800000> : vector<32xf32>
    %23 = vector.multi_reduction <maximumf>, %22, %cst_9 [1] : vector<32x16xf32> to vector<32xf32>
    %24 = vector.shape_cast %23 : vector<32xf32> to vector<32x1xf32>
    %25 = vector.broadcast %24 : vector<32x1xf32> to vector<32x16xf32>
    %26 = arith.subf %22, %25 : vector<32x16xf32>
    %27 = math.exp %26 : vector<32x16xf32>
    %cst_10 = arith.constant dense<0.000000e+00> : vector<32xf32>
    %28 = vector.multi_reduction <add>, %27, %cst_10 [1] : vector<32x16xf32> to vector<32xf32>
    %29 = vector.shape_cast %28 : vector<32xf32> to vector<32x1xf32>
    %30 = tpu.reciprocal %29 : vector<32x1xf32> -> vector<32x1xf32>
    %31 = vector.broadcast %30 : vector<32x1xf32> to vector<32x16xf32>
    %32 = arith.mulf %27, %31 : vector<32x16xf32>
    %33 = vector.extract_strided_slice %32 {offsets = [0, 0], sizes = [8, 16], strides = [1, 1]} : vector<32x16xf32> to vector<8x16xf32>
    %34 = vector.extract_strided_slice %9 {offsets = [0, 0], sizes = [16, 8], strides = [1, 1]} : vector<16x32xf32> to vector<16x8xf32>
    %cst_11 = arith.constant dense<0.000000e+00> : vector<8x8xf32>
    %35 = tpu.matmul %33, %34, %cst_11 {dimension_numbers = #tpu.dot_dimension_numbers<[1], [0], [0], [1], [0, 0, 1, 1], [], []>} : vector<8x16xf32>, vector<16x8xf32>, vector<8x8xf32> -> vector<8x8xf32>
    %36 = vector.extract_strided_slice %32 {offsets = [8, 0], sizes = [8, 16], strides = [1, 1]} : vector<32x16xf32> to vector<8x16xf32>
    %37 = vector.extract_strided_slice %9 {offsets = [0, 8], sizes = [16, 8], strides = [1, 1]} : vector<16x32xf32> to vector<16x8xf32>
    %cst_12 = arith.constant dense<0.000000e+00> : vector<8x8xf32>
    %38 = tpu.matmul %36, %37, %cst_12 {dimension_numbers = #tpu.dot_dimension_numbers<[1], [0], [0], [1], [0, 0, 1, 1], [], []>} : vector<8x16xf32>, vector<16x8xf32>, vector<8x8xf32> -> vector<8x8xf32>
    %39 = vector.extract_strided_slice %32 {offsets = [16, 0], sizes = [8, 16], strides = [1, 1]} : vector<32x16xf32> to vector<8x16xf32>
    %40 = vector.extract_strided_slice %9 {offsets = [0, 16], sizes = [16, 8], strides = [1, 1]} : vector<16x32xf32> to vector<16x8xf32>
    %cst_13 = arith.constant dense<0.000000e+00> : vector<8x8xf32>
    %41 = tpu.matmul %39, %40, %cst_13 {dimension_numbers = #tpu.dot_dimension_numbers<[1], [0], [0], [1], [0, 0, 1, 1], [], []>} : vector<8x16xf32>, vector<16x8xf32>, vector<8x8xf32> -> vector<8x8xf32>
    %42 = vector.extract_strided_slice %32 {offsets = [24, 0], sizes = [8, 16], strides = [1, 1]} : vector<32x16xf32> to vector<8x16xf32>
    %43 = vector.extract_strided_slice %9 {offsets = [0, 24], sizes = [16, 8], strides = [1, 1]} : vector<16x32xf32> to vector<16x8xf32>
    %cst_14 = arith.constant dense<0.000000e+00> : vector<8x8xf32>
    %44 = tpu.matmul %42, %43, %cst_14 {dimension_numbers = #tpu.dot_dimension_numbers<[1], [0], [0], [1], [0, 0, 1, 1], [], []>} : vector<8x16xf32>, vector<16x8xf32>, vector<8x8xf32> -> vector<8x8xf32>
    %45 = tpu.concatenate %35, %38, %41, %44 in 1 : vector<8x8xf32>, vector<8x8xf32>, vector<8x8xf32>, vector<8x8xf32> -> vector<8x32xf32>
    %c0_15 = arith.constant 0 : index
    %c96 = arith.constant 96 : index
    %46 = vector.load %arg2[%c0_15, %c96] : memref<136x128xf32, #tpu.memory_space<vmem>>, vector<32x32xf32>
    %cst_16 = arith.constant dense<0.000000e+00> : vector<8x32xf32>
    %47 = tpu.matmul %45, %46, %cst_16 {dimension_numbers = #tpu.dot_dimension_numbers<[1], [0], [0], [1], [0, 0, 1, 1], [], []>} : vector<8x32xf32>, vector<32x32xf32>, vector<8x32xf32> -> vector<8x32xf32>
    %c129 = arith.constant 129 : index
    %c0_17 = arith.constant 0 : index
    %48 = vector.load %arg2[%c129, %c0_17] : memref<136x128xf32, #tpu.memory_space<vmem>>, vector<1x32xf32>
    %49 = vector.broadcast %48 : vector<1x32xf32> to vector<8x32xf32>
    %50 = arith.addf %47, %49 : vector<8x32xf32>
    %51 = vector.extract_strided_slice %1 {offsets = [0, 0], sizes = [8, 32], strides = [1, 1]} : vector<40x32xf32> to vector<8x32xf32>
    %52 = arith.addf %50, %51 : vector<8x32xf32>
    %cst_18 = arith.constant dense<0.000000e+00> : vector<8xf32>
    %53 = vector.multi_reduction <add>, %52, %cst_18 [1] : vector<8x32xf32> to vector<8xf32>
    %54 = vector.shape_cast %53 : vector<8xf32> to vector<8x1xf32>
    %cst_19 = arith.constant 3.200000e+01 : f32
    %55 = vector.broadcast %cst_19 : f32 to vector<8x1xf32>
    %56 = arith.divf %54, %55 : vector<8x1xf32>
    %57 = vector.broadcast %56 : vector<8x1xf32> to vector<8x32xf32>
    %58 = arith.subf %52, %57 : vector<8x32xf32>
    %59 = arith.mulf %58, %58 : vector<8x32xf32>
    %cst_20 = arith.constant dense<0.000000e+00> : vector<8xf32>
    %60 = vector.multi_reduction <add>, %59, %cst_20 [1] : vector<8x32xf32> to vector<8xf32>
    %61 = vector.shape_cast %60 : vector<8xf32> to vector<8x1xf32>
    %cst_21 = arith.constant 3.200000e+01 : f32
    %62 = vector.broadcast %cst_21 : f32 to vector<8x1xf32>
    %63 = arith.divf %61, %62 : vector<8x1xf32>
    %cst_22 = arith.constant 9.99999974E-6 : f32
    %64 = vector.broadcast %cst_22 : f32 to vector<8x1xf32>
    %65 = arith.addf %63, %64 : vector<8x1xf32>
    %66 = math.rsqrt %65 : vector<8x1xf32>
    %67 = vector.broadcast %66 : vector<8x1xf32> to vector<8x32xf32>
    %68 = arith.mulf %58, %67 : vector<8x32xf32>
    %c132 = arith.constant 132 : index
    %c0_23 = arith.constant 0 : index
    %69 = vector.load %arg2[%c132, %c0_23] : memref<136x128xf32, #tpu.memory_space<vmem>>, vector<1x32xf32>
    %70 = vector.broadcast %69 : vector<1x32xf32> to vector<8x32xf32>
    %71 = arith.mulf %68, %70 : vector<8x32xf32>
    %c133 = arith.constant 133 : index
    %c0_24 = arith.constant 0 : index
    %72 = vector.load %arg2[%c133, %c0_24] : memref<136x128xf32, #tpu.memory_space<vmem>>, vector<1x32xf32>
    %73 = vector.broadcast %72 : vector<1x32xf32> to vector<8x32xf32>
    %74 = arith.addf %71, %73 : vector<8x32xf32>
    %c32 = arith.constant 32 : index
    %c0_25 = arith.constant 0 : index
    %75 = vector.load %arg2[%c32, %c0_25] : memref<136x128xf32, #tpu.memory_space<vmem>>, vector<32x64xf32>
    %c64 = arith.constant 64 : index
    %c0_26 = arith.constant 0 : index
    %76 = vector.load %arg2[%c64, %c0_26] : memref<136x128xf32, #tpu.memory_space<vmem>>, vector<64x32xf32>
    %cst_27 = arith.constant dense<0.000000e+00> : vector<8x64xf32>
    %77 = tpu.matmul %74, %75, %cst_27 {dimension_numbers = #tpu.dot_dimension_numbers<[1], [0], [0], [1], [0, 0, 1, 1], [], []>} : vector<8x32xf32>, vector<32x64xf32>, vector<8x64xf32> -> vector<8x64xf32>
    %c130 = arith.constant 130 : index
    %c0_28 = arith.constant 0 : index
    %78 = vector.load %arg2[%c130, %c0_28] : memref<136x128xf32, #tpu.memory_space<vmem>>, vector<1x64xf32>
    %79 = vector.broadcast %78 : vector<1x64xf32> to vector<8x64xf32>
    %80 = arith.addf %77, %79 : vector<8x64xf32>
    %cst_29 = arith.constant 0.000000e+00 : f32
    %81 = vector.broadcast %cst_29 : f32 to vector<8x64xf32>
    %82 = arith.maximumf %80, %81 : vector<8x64xf32>
    %cst_30 = arith.constant dense<0.000000e+00> : vector<8x32xf32>
    %83 = tpu.matmul %82, %76, %cst_30 {dimension_numbers = #tpu.dot_dimension_numbers<[1], [0], [0], [1], [0, 0, 1, 1], [], []>} : vector<8x64xf32>, vector<64x32xf32>, vector<8x32xf32> -> vector<8x32xf32>
    %c131 = arith.constant 131 : index
    %c0_31 = arith.constant 0 : index
    %84 = vector.load %arg2[%c131, %c0_31] : memref<136x128xf32, #tpu.memory_space<vmem>>, vector<1x32xf32>
    %85 = vector.broadcast %84 : vector<1x32xf32> to vector<8x32xf32>
    %86 = arith.addf %83, %85 : vector<8x32xf32>
    %87 = arith.addf %74, %86 : vector<8x32xf32>
    %cst_32 = arith.constant dense<0.000000e+00> : vector<8xf32>
    %88 = vector.multi_reduction <add>, %87, %cst_32 [1] : vector<8x32xf32> to vector<8xf32>
    %89 = vector.shape_cast %88 : vector<8xf32> to vector<8x1xf32>
    %cst_33 = arith.constant 3.200000e+01 : f32
    %90 = vector.broadcast %cst_33 : f32 to vector<8x1xf32>
    %91 = arith.divf %89, %90 : vector<8x1xf32>
    %92 = vector.broadcast %91 : vector<8x1xf32> to vector<8x32xf32>
    %93 = arith.subf %87, %92 : vector<8x32xf32>
    %94 = arith.mulf %93, %93 : vector<8x32xf32>
    %cst_34 = arith.constant dense<0.000000e+00> : vector<8xf32>
    %95 = vector.multi_reduction <add>, %94, %cst_34 [1] : vector<8x32xf32> to vector<8xf32>
    %96 = vector.shape_cast %95 : vector<8xf32> to vector<8x1xf32>
    %cst_35 = arith.constant 3.200000e+01 : f32
    %97 = vector.broadcast %cst_35 : f32 to vector<8x1xf32>
    %98 = arith.divf %96, %97 : vector<8x1xf32>
    %cst_36 = arith.constant 9.99999974E-6 : f32
    %99 = vector.broadcast %cst_36 : f32 to vector<8x1xf32>
    %100 = arith.addf %98, %99 : vector<8x1xf32>
    %101 = math.rsqrt %100 : vector<8x1xf32>
    %102 = vector.broadcast %101 : vector<8x1xf32> to vector<8x32xf32>
    %103 = arith.mulf %93, %102 : vector<8x32xf32>
    %c134 = arith.constant 134 : index
    %c0_37 = arith.constant 0 : index
    %104 = vector.load %arg2[%c134, %c0_37] : memref<136x128xf32, #tpu.memory_space<vmem>>, vector<1x32xf32>
    %105 = vector.broadcast %104 : vector<1x32xf32> to vector<8x32xf32>
    %106 = arith.mulf %103, %105 : vector<8x32xf32>
    %c135 = arith.constant 135 : index
    %c0_38 = arith.constant 0 : index
    %107 = vector.load %arg2[%c135, %c0_38] : memref<136x128xf32, #tpu.memory_space<vmem>>, vector<1x32xf32>
    %108 = vector.broadcast %107 : vector<1x32xf32> to vector<8x32xf32>
    %109 = arith.addf %106, %108 : vector<8x32xf32>
    %c0_39 = arith.constant 0 : index
    %c0_40 = arith.constant 0 : index
    %c0_41 = arith.constant 0 : index
    %110 = vector.load %arg3[%c0_39, %c0_40, %c0_41] : memref<1x8x32xf32, #tpu.memory_space<vmem>>, vector<1x8x32xf32>
    %111 = vector.shape_cast %110 : vector<1x8x32xf32> to vector<8x32xf32>
    %112 = vector.shape_cast %109 : vector<8x32xf32> to vector<1x8x32xf32>
    tpu.vector_store %arg3[%c0_39, %c0_40, %c0_41], %112 {strides = array<i32>} : memref<1x8x32xf32, #tpu.memory_space<vmem>>, vector<1x8x32xf32>,
    return
  }
  func.func @transform_0(%arg0: i32) -> (i32, i32, i32) {
    %c0_i32 = arith.constant 0 : i32
    %c0_i32_0 = arith.constant 0 : i32
    %c0_i32_1 = arith.constant 0 : i32
    return %arg0, %c0_i32, %c0_i32_0 : i32, i32, i32
  }
  func.func @transform_1(%arg0: i32) -> (i32, i32) {
    %c0_i32 = arith.constant 0 : i32
    %c0_i32_0 = arith.constant 0 : i32
    %c0_i32_1 = arith.constant 0 : i32
    return %c0_i32, %c0_i32_0 : i32, i32
  }
  func.func @transform_2(%arg0: i32) -> (i32, i32, i32) {
    %c0_i32 = arith.constant 0 : i32
    %c0_i32_0 = arith.constant 0 : i32
    %c0_i32_1 = arith.constant 0 : i32
    return %arg0, %c0_i32, %c0_i32_0 : i32, i32, i32
  }
}

</mosaic_0001>

<llo_original>
// kernel: tpu_custom_call.1
$region0: #{tpu_custom_call.1}
  #allocation0 [shape = 'u32[]', space=smem, size = 0x4, offset = 0x4, fixed_abs, tag = 'smem constant byte address 0x4 - core index']
  #allocation1 [shape = 'u32[144,128]{1,0:T(1,128)}', space=vmem, size = 0x12000, scoped, tag = 'internal scratch']
  %s0 = inlined_call_operand.vmem [shape: f32[4,40,32], index: 0, kind: input, shape index: {}]
  %s1 = inlined_call_operand.vmem [shape: f32[136,128], index: 1, kind: input, shape index: {}]
  %s2 = inlined_call_operand.hbm [shape: f32[4,8,32], index: 2, kind: output, shape index: {}]
  %s3 = sld [smem:[#allocation0]]
  $region41: #{tpu_custom_call.1} parent=0
    _
  %s5 = ssub.s32 1, %s3
  %s6 = scalar_select 0, %s5, %s3
  $region1: #{tpu_custom_call.1} parent=0
    #allocation2 [shape = 'u8[8192]{0}', space=vmem, size = 0x2000, scoped, tag = 'output window, operand 0']
    #allocation3 [shape = 's32[2]{0}', space=sflag, size = 0x8, scoped, tag = 'scoped memory for tpu_custom_call.1']
    %7 = vsyncpa [#allocation3], 0
    %s8 = scalar_lea.sflag [#allocation3], 1
    %9 = vsyncpa %s8, 0
    loop: start=0, step=1, limit=6
    $region2: #{tpu_custom_call.1} parent=1 // loop_pre_header
      _
    $region3: #{tpu_custom_call.1} parent=1 // loop_header
      %s11 = sphi 0, %s15
      %p12 = scmp.ge.s32.totalorder %s11, 6
      %s21 = sphi 0, %s23
      %s24 = sphi 0, %s21
      %s25 = sphi 0, %s24
      %s41 = sphi 0, %s25
      %s45 = sphi 0, %s45
      %s47 = sphi 0, %s45
      %s48 = sphi 0, %s47
      %s62 = sphi 0, %s48
      %s68 = sphi 0, %s70
      %s71 = sphi 0, %s68
      %s72 = sphi 0, %s71
      %s88 = sphi 0, %s72
    $region4: #{tpu_custom_call.1} parent=1 // loop_header_branch
      %14 = sbr.rel (%p12) target = $region8
    $region5: #{tpu_custom_call.1} parent=1 // loop_body
      %s16 = ssub.s32 %s11, 1
      %s17 = ssub.s32 %s11, 2
      %s18 = sadd.s32 %s11, 1
      %s19 = ssub.s32 %s11, %s18
      %p20 = scmp.eq.s32.totalorder %s19, 0
      %s22 = sadd.s32 %s21, 1
      %s23 = scalar_select %p20, %s21, %s22
      %p26 = pneg %p20
      %p27 = scmp.eq.s32.totalorder %s11, 3
      %p28 = por %p26, %p27
      %p29 = scmp.ne.s32.totalorder %s21, %s24
      %p30 = scmp.eq.s32.totalorder %s11, 0
      %p31 = por %p29, %p30
      %p32 = scmp.ne.s32.totalorder %s21, %s24
      %p33 = scmp.eq.s32.totalorder %s16, 3
      %p34 = por %p32, %p33
      %p35 = scmp.ne.s32.totalorder %s24, %s25
      %p36 = scmp.eq.s32.totalorder %s16, 0
      %p37 = por %p35, %p36
      %p38 = scmp.ne.s32.totalorder %s24, %s25
      %p39 = scmp.eq.s32.totalorder %s17, 3
      %p40 = por %p38, %p39
      %p42 = scmp.ne.s32.totalorder %s25, %s41
      %p43 = scmp.eq.s32.totalorder %s17, 0
      %p44 = por %p42, %p43
      %s46 = sadd.s32 %s45, 1
      %p49 = scmp.eq.s32.totalorder %s11, 3
      %p50 = scmp.ne.s32.totalorder %s45, %s47
      %p51 = scmp.eq.s32.totalorder %s11, 0
      %p52 = por %p50, %p51
      %p53 = scmp.ne.s32.totalorder %s45, %s47
      %p54 = scmp.eq.s32.totalorder %s16, 3
      %p55 = por %p53, %p54
      %p56 = scmp.ne.s32.totalorder %s47, %s48
      %p57 = scmp.eq.s32.totalorder %s16, 0
      %p58 = por %p56, %p57
      %p59 = scmp.ne.s32.totalorder %s47, %s48
      %p60 = scmp.eq.s32.totalorder %s17, 3
      %p61 = por %p59, %p60
      %p63 = scmp.ne.s32.totalorder %s48, %s62
      %p64 = scmp.eq.s32.totalorder %s17, 0
      %p65 = por %p63, %p64
      %s66 = ssub.s32 %s11, %s18
      %p67 = scmp.eq.s32.totalorder %s66, 0
      %s69 = sadd.s32 %s68, 1
      %s70 = scalar_select %p67, %s68, %s69
      %p73 = pneg %p67
      %p74 = scmp.eq.s32.totalorder %s11, 3
      %p75 = por %p73, %p74
      %p76 = scmp.ne.s32.totalorder %s68, %s71
      %p77 = scmp.eq.s32.totalorder %s11, 0
      %p78 = por %p76, %p77
      %p79 = scmp.ne.s32.totalorder %s68, %s71
      %p80 = scmp.eq.s32.totalorder %s16, 3
      %p81 = por %p79, %p80
      %p82 = scmp.ne.s32.totalorder %s71, %s72
      %p83 = scmp.eq.s32.totalorder %s16, 0
      %p84 = por %p82, %p83
      %p85 = scmp.ne.s32.totalorder %s71, %s72
      %p86 = scmp.eq.s32.totalorder %s17, 3
      %p87 = por %p85, %p86
      %p89 = scmp.ne.s32.totalorder %s72, %s88
      %p90 = scmp.eq.s32.totalorder %s17, 0
      %p91 = por %p89, %p90
      %p92 = scmp.le.s32.totalorder 1, %s11
      %p93 = scmp.lt.s32.totalorder %s11, 5
      %p94 = pnand %p92, %p93
      %p95 = pneg %p94
      // Predicated region
      $region9: #{tpu_custom_call.1} parent=5 // pred_check
        _
      $region10: #{tpu_custom_call.1} parent=5 // pred_check_branch
        %97 = sbr.rel (%p94) target = $region12
      $region11: #{tpu_custom_call.1} parent=5 // pred_region
        %s98 = ssub.s32 %s11, 1
        // Predicated region
        $region13: #{tpu_custom_call.1} parent=11 // pred_check
          %p99 = pneg %p58
        $region14: #{tpu_custom_call.1} parent=11 // pred_check_branch
          %101 = sbr.rel (%p99) target = $region16
        $region15: #{tpu_custom_call.1} parent=11 // pred_region
          _
        $region16: #{tpu_custom_call.1} parent=11 // pred_fallthru
          _
      $region12: #{tpu_custom_call.1} parent=5 // pred_fallthru
        _
      %p102 = scmp.lt.s32.totalorder %s11, 4
      // Predicated region
      $region17: #{tpu_custom_call.1} parent=5 // pred_check
        %p103 = pneg %p102
      $region18: #{tpu_custom_call.1} parent=5 // pred_check_branch
        %105 = sbr.rel (%p103) target = $region20
      $region19: #{tpu_custom_call.1} parent=5 // pred_region
        // Predicated region
        $region21: #{tpu_custom_call.1} parent=19 // pred_check
          %p106 = pneg %p31
        $region22: #{tpu_custom_call.1} parent=19 // pred_check_branch
          %108 = sbr.rel (%p106) target = $region24
        $region23: #{tpu_custom_call.1} parent=19 // pred_region
          %p109 = scmp.lt.s32.totalorder %s11, 3
          %s110 = scalar_select %p109, %s11, 3
          %s111 = smul.addr %s110, 5
          %s112 = smul.addr %s111, 8
          %s113 = scalar_lea.vmem %s0, %s112
        $region24: #{tpu_custom_call.1} parent=19 // pred_fallthru
          _
      $region20: #{tpu_custom_call.1} parent=5 // pred_fallthru
        _
      %p114 = scmp.le.s32.totalorder 1, %s11
      %p115 = scmp.lt.s32.totalorder %s11, 5
      %p116 = pnand %p114, %p115
      %p117 = pneg %p116
      // Predicated region
      $region25: #{tpu_custom_call.1} parent=5 // pred_check
        _
      $region26: #{tpu_custom_call.1} parent=5 // pred_check_branch
        %119 = sbr.rel (%p116) target = $region28
      $region27: #{tpu_custom_call.1} parent=5 // pred_region
        %s120 = ssub.s32 %s11, 1
        %p121 = scmp.lt.s32.totalorder %s16, 3
        %s122 = scalar_select %p121, %s16, 3
        %s123 = smul.addr %s122, 5
        %s124 = smul.addr %s123, 8
        %s125 = scalar_lea.vmem %s0, %s124
        %p126 = pneg %p37
        %p127 = pneg %p34
        %p128 = pneg %p58
        %p129 = pneg %p55
        %p130 = pneg %p84
        %p131 = pneg %p81
        %s132 = sand.u32 %s71, 1
        %s133 = scalar_lea.sflag [#allocation3], %s132
        %s134 = sand.u32 %s71, 1
        %s135 = smul.addr %s134, 8
        %s136 = scalar_lea.vmem [#allocation2], %s135
        %p137 = scmp.lt.s32.totalorder %s16, 3
        %s138 = scalar_select %p137, %s16, 3
        %s139 = smul.addr %s138, 5
        %s140 = smul.addr %s139, 8
        %s141 = scalar_lea.vmem %s0, %s140
        %v142 = vld [vmem:[%s141] sm:$0xff]
        %v143 = vld [vmem:[%s141 + $0x8] sm:$0xff]
        %v144 = vld [vmem:[%s141 + $0x10] sm:$0xff]
        %v145 = vld [vmem:[%s141 + $0x18] sm:$0xff]
        %v146 = vld [vmem:[%s141 + $0x20] sm:$0xff]
        %v147 = vld [vmem:[%s1] sm:$0xff]
        %v148 = vld [vmem:[%s1 + $0x8] sm:$0xff]
        %v149 = vld [vmem:[%s1 + $0x10] sm:$0xff]
        %v150 = vld [vmem:[%s1 + $0x18] sm:$0xff]
        %v151 = vld [vmem:[%s1 + $0x80] sm:$0x1]
        %v152 = vlaneseq
        %v153 = vshrl.u32 %v152, 7
        %v154 = vsub.s32 0, %v153
        %v155 = vrot.slane %v151, %v154
        %vm156 = vcmask 261120
        %v158 = vsel %vm156, %v142, 0
        %v161 = vsel %vm156, %v143, 0
        %v164 = vsel %vm156, %v144, 0
        %v167 = vsel %vm156, %v145, 0
        %v170 = vsel %vm156, %v146, 0
        %172 = vmatprep.subr.mxu0 0.0
        %173 = vmatpush1.msra.mxu0 %v147
        %174 = vmatprep.subr.mxu0 0.0
        %175 = vmatpush1.msra.mxu0 %v148
        %176 = vmatprep.subr.mxu0 0.0
        %177 = vmatpush1.msra.mxu0 %v149
        %178 = vmatprep.subr.mxu0 0.0
        %179 = vmatpush1.msra.mxu0 %v150
        %180 = vmatprep.subr.mxu0 0.0
        %181 = vmatpush1.msra.mxu0 0.0
        %182 = vmatprep.subr.mxu0 0.0
        %183 = vmatpush1.msra.mxu0 0.0
        %184 = vmatprep.subr.mxu0 0.0
        %185 = vmatpush1.msra.mxu0 0.0
        %186 = vmatprep.subr.mxu0 0.0
        %187 = vmatpush1.msra.mxu0 0.0
        %188 = vmatprep.subr.mxu0 0.0
        %189 = vmatpush1.msra.mxu0 0.0
        %190 = vmatprep.subr.mxu0 0.0
        %191 = vmatpush1.msra.mxu0 0.0
        %192 = vmatprep.subr.mxu0 0.0
        %193 = vmatpush1.msra.mxu0 0.0
        %194 = vmatprep.subr.mxu0 0.0
        %195 = vmatpush1.msra.mxu0 0.0
        %196 = vmatprep.subr.mxu0 0.0
        %197 = vmatpush1.msra.mxu0 0.0
        %198 = vmatprep.subr.mxu0 0.0
        %199 = vmatpush1.msra.mxu0 0.0
        %200 = vmatprep.subr.mxu0 0.0
        %201 = vmatpush1.msra.mxu0 0.0
        %202 = vmatprep.subr.mxu0 0.0
        %203 = vmatpush1.msra.mxu0 0.0
        %204 = vmatprep.subr.mxu0 0.0
        %205 = vmatpush1.msra.mxu0 0.0
        %206 = vmatprep.subr.mxu0 0.0
        %207 = vmatpush1.msra.mxu0 0.0
        %208 = vmatprep.subr.mxu0 0.0
        %209 = vmatpush1.msra.mxu0 0.0
        %210 = vmatprep.subr.mxu0 0.0
        %211 = vmatpush1.msra.mxu0 0.0
        %212 = vmatprep.subr.mxu0 0.0
        %213 = vmatpush1.msra.mxu0 0.0
        %214 = vmatprep.subr.mxu0 0.0
        %215 = vmatpush1.msra.mxu0 0.0
        %216 = vmatprep.subr.mxu0 0.0
        %217 = vmatpush1.msra.mxu0 0.0
        %218 = vmatprep.subr.mxu0 0.0
        %219 = vmatpush1.msra.mxu0 0.0
        %220 = vmatprep.subr.mxu0 0.0
        %221 = vmatpush1.msra.mxu0 0.0
        %222 = vmatprep.subr.mxu0 0.0
        %223 = vmatpush1.msra.mxu0 0.0
        %224 = vmatprep.subr.mxu0 0.0
        %225 = vmatpush1.msra.mxu0 0.0
        %226 = vmatprep.subr.mxu0 0.0
        %227 = vmatpush1.msra.mxu0 0.0
        %228 = vmatprep.subr.mxu0 0.0
        %229 = vmatpush1.msra.mxu0 0.0
        %230 = vmatprep.subr.mxu0 0.0
        %231 = vmatpush1.msra.mxu0 0.0
        %232 = vmatprep.subr.mxu0 0.0
        %233 = vmatpush1.msra.mxu0 0.0
        %234 = vmatprep.subr.mxu0 0.0
        %235 = vmatpush1.msra.mxu0 0.0
        %236 = vmatprep.mubr.f32.mxu0 0.0
        %237 = vmatmul.mubr.f32.gmra.mrb[0].mxu0 %v158
        %v238 = vpop.f32.mrb[0].mxu0
        %v239 = vadd.f32 %v155, %v238
        %v240 = vpop.f32.mrb[0].mxu0
        %241 = vmatprep.mubr.f32.mxu0 0.0
        %242 = vmatmul.mubr.f32.gmra.mrb[0].mxu0 %v161
        %v243 = vpop.f32.mrb[0].mxu0
        %v244 = vadd.f32 %v155, %v243
        %v245 = vpop.f32.mrb[0].mxu0
        %246 = vmatprep.mubr.f32.mxu0 0.0
        %247 = vmatmul.mubr.f32.gmra.mrb[0].mxu0 %v164
        %v248 = vpop.f32.mrb[0].mxu0
        %v249 = vadd.f32 %v155, %v248
        %v250 = vpop.f32.mrb[0].mxu0
        %251 = vmatprep.mubr.f32.mxu0 0.0
        %252 = vmatmul.mubr.f32.gmra.mrb[0].mxu0 %v167
        %v253 = vpop.f32.mrb[0].mxu0
        %v254 = vadd.f32 %v155, %v253
        %v255 = vpop.f32.mrb[0].mxu0
        %256 = vmatprep.mubr.f32.mxu0 0.0
        %257 = vmatmul.mubr.f32.gmra.mrb[0].mxu0 %v170
        %v258 = vpop.f32.mrb[0].mxu0
        %v259 = vadd.f32 %v155, %v258
        %v260 = vpop.f32.mrb[0].mxu0
        %261 = vdwg.mxu0
        %264 = vrot.lane.b32.xlu0 %v244, 96
        %v265 = vpop.permute.xlu0 %264
        %266 = vrot.lane.b32.xlu0 %v249, 96
        %v267 = vpop.permute.xlu0 %266
        %vm268 = vcmask 64512
        %v270 = vsel %vm268, %v239, 0
        %v272 = vsel %vm268, %v265, 0
        %v274 = vsel %vm268, %v267, 0
        %276 = vmatprep.subr.mxu0 0.0
        %277 = vmatpush1.xpose.msra.mxu0 %v272
        %278 = vmatprep.subr.mxu0 0.0
        %279 = vmatpush1.xpose.msra.mxu0 %v274
        %280 = vmatprep.subr.mxu0 0.0
        %281 = vmatpush1.xpose.msra.mxu0 0.0
        %282 = vmatprep.subr.mxu0 0.0
        %283 = vmatpush1.xpose.msra.mxu0 0.0
        %284 = vmatprep.subr.mxu0 0.0
        %285 = vmatpush1.xpose.msra.mxu0 0.0
        %286 = vmatprep.subr.mxu0 0.0
        %287 = vmatpush1.xpose.msra.mxu0 0.0
        %288 = vmatprep.subr.mxu0 0.0
        %289 = vmatpush1.xpose.msra.mxu0 0.0
        %290 = vmatprep.subr.mxu0 0.0
        %291 = vmatpush1.xpose.msra.mxu0 0.0
        %292 = vmatprep.subr.mxu0 0.0
        %293 = vmatpush1.xpose.msra.mxu0 0.0
        %294 = vmatprep.subr.mxu0 0.0
        %295 = vmatpush1.xpose.msra.mxu0 0.0
        %296 = vmatprep.subr.mxu0 0.0
        %297 = vmatpush1.xpose.msra.mxu0 0.0
        %298 = vmatprep.subr.mxu0 0.0
        %299 = vmatpush1.xpose.msra.mxu0 0.0
        %300 = vmatprep.subr.mxu0 0.0
        %301 = vmatpush1.xpose.msra.mxu0 0.0
        %302 = vmatprep.subr.mxu0 0.0
        %303 = vmatpush1.xpose.msra.mxu0 0.0
        %304 = vmatprep.subr.mxu0 0.0
        %305 = vmatpush1.xpose.msra.mxu0 0.0
        %306 = vmatprep.subr.mxu0 0.0
        %307 = vmatpush1.xpose.msra.mxu0 0.0
        %308 = vmatprep.subr.mxu0 0.0
        %309 = vmatpush1.xpose.msra.mxu0 0.0
        %310 = vmatprep.subr.mxu0 0.0
        %311 = vmatpush1.xpose.msra.mxu0 0.0
        %312 = vmatprep.subr.mxu0 0.0
        %313 = vmatpush1.xpose.msra.mxu0 0.0
        %314 = vmatprep.subr.mxu0 0.0
        %315 = vmatpush1.xpose.msra.mxu0 0.0
        %316 = vmatprep.subr.mxu0 0.0
        %317 = vmatpush1.xpose.msra.mxu0 0.0
        %318 = vmatprep.subr.mxu0 0.0
        %319 = vmatpush1.xpose.msra.mxu0 0.0
        %320 = vmatprep.subr.mxu0 0.0
        %321 = vmatpush1.xpose.msra.mxu0 0.0
        %322 = vmatprep.subr.mxu0 0.0
        %323 = vmatpush1.xpose.msra.mxu0 0.0
        %324 = vmatprep.subr.mxu0 0.0
        %325 = vmatpush1.xpose.msra.mxu0 0.0
        %326 = vmatprep.subr.mxu0 0.0
        %327 = vmatpush1.xpose.msra.mxu0 0.0
        %328 = vmatprep.subr.mxu0 0.0
        %329 = vmatpush1.xpose.msra.mxu0 0.0
        %330 = vmatprep.subr.mxu0 0.0
        %331 = vmatpush1.xpose.msra.mxu0 0.0
        %332 = vmatprep.subr.mxu0 0.0
        %333 = vmatpush1.xpose.msra.mxu0 0.0
        %334 = vmatprep.subr.mxu0 0.0
        %335 = vmatpush1.xpose.msra.mxu0 0.0
        %336 = vmatprep.subr.mxu0 0.0
        %337 = vmatpush1.xpose.msra.mxu0 0.0
        %338 = vmatprep.subr.mxu0 0.0
        %339 = vmatpush1.xpose.msra.mxu0 0.0
        %340 = vmatprep.mubr.f32.mxu0 0.0
        %341 = vmatmul.mubr.f32.gmra.mrb[0].mxu0 %v270
        %v342 = vpop.f32.mrb[0].mxu0
        %v343 = vadd.f32 0.0, %v342
        %v344 = vpop.f32.mrb[0].mxu0
        %345 = vdwg.mxu0
        %346 = vrot.lane.b32.xlu0 %v239, 120
        %v347 = vpop.permute.xlu0 %346
        %348 = vrot.lane.b32.xlu0 %v244, 88
        %v349 = vpop.permute.xlu0 %348
        %350 = vrot.lane.b32.xlu0 %v249, 88
        %v351 = vpop.permute.xlu0 %350
        %v352 = vsel %vm268, %v347, 0
        %v354 = vsel %vm268, %v349, 0
        %v356 = vsel %vm268, %v351, 0
        %358 = vmatprep.subr.mxu0 0.0
        %359 = vmatpush1.xpose.msra.mxu0 %v354
        %360 = vmatprep.subr.mxu0 0.0
        %361 = vmatpush1.xpose.msra.mxu0 %v356
        %362 = vmatprep.subr.mxu0 0.0
        %363 = vmatpush1.xpose.msra.mxu0 0.0
        %364 = vmatprep.subr.mxu0 0.0
        %365 = vmatpush1.xpose.msra.mxu0 0.0
        %366 = vmatprep.subr.mxu0 0.0
        %367 = vmatpush1.xpose.msra.mxu0 0.0
        %368 = vmatprep.subr.mxu0 0.0
        %369 = vmatpush1.xpose.msra.mxu0 0.0
        %370 = vmatprep.subr.mxu0 0.0
        %371 = vmatpush1.xpose.msra.mxu0 0.0
        %372 = vmatprep.subr.mxu0 0.0
        %373 = vmatpush1.xpose.msra.mxu0 0.0
        %374 = vmatprep.subr.mxu0 0.0
        %375 = vmatpush1.xpose.msra.mxu0 0.0
        %376 = vmatprep.subr.mxu0 0.0
        %377 = vmatpush1.xpose.msra.mxu0 0.0
        %378 = vmatprep.subr.mxu0 0.0
        %379 = vmatpush1.xpose.msra.mxu0 0.0
        %380 = vmatprep.subr.mxu0 0.0
        %381 = vmatpush1.xpose.msra.mxu0 0.0
        %382 = vmatprep.subr.mxu0 0.0
        %383 = vmatpush1.xpose.msra.mxu0 0.0
        %384 = vmatprep.subr.mxu0 0.0
        %385 = vmatpush1.xpose.msra.mxu0 0.0
        %386 = vmatprep.subr.mxu0 0.0
        %387 = vmatpush1.xpose.msra.mxu0 0.0
        %388 = vmatprep.subr.mxu0 0.0
        %389 = vmatpush1.xpose.msra.mxu0 0.0
        %390 = vmatprep.subr.mxu0 0.0
        %391 = vmatpush1.xpose.msra.mxu0 0.0
        %392 = vmatprep.subr.mxu0 0.0
        %393 = vmatpush1.xpose.msra.mxu0 0.0
        %394 = vmatprep.subr.mxu0 0.0
        %395 = vmatpush1.xpose.msra.mxu0 0.0
        %396 = vmatprep.subr.mxu0 0.0
        %397 = vmatpush1.xpose.msra.mxu0 0.0
        %398 = vmatprep.subr.mxu0 0.0
        %399 = vmatpush1.xpose.msra.mxu0 0.0
        %400 = vmatprep.subr.mxu0 0.0
        %401 = vmatpush1.xpose.msra.mxu0 0.0
        %402 = vmatprep.subr.mxu0 0.0
        %403 = vmatpush1.xpose.msra.mxu0 0.0
        %404 = vmatprep.subr.mxu0 0.0
        %405 = vmatpush1.xpose.msra.mxu0 0.0
        %406 = vmatprep.subr.mxu0 0.0
        %407 = vmatpush1.xpose.msra.mxu0 0.0
        %408 = vmatprep.subr.mxu0 0.0
        %409 = vmatpush1.xpose.msra.mxu0 0.0
        %410 = vmatprep.subr.mxu0 0.0
        %411 = vmatpush1.xpose.msra.mxu0 0.0
        %412 = vmatprep.subr.mxu0 0.0
        %413 = vmatpush1.xpose.msra.mxu0 0.0
        %414 = vmatprep.subr.mxu0 0.0
        %415 = vmatpush1.xpose.msra.mxu0 0.0
        %416 = vmatprep.subr.mxu0 0.0
        %417 = vmatpush1.xpose.msra.mxu0 0.0
        %418 = vmatprep.subr.mxu0 0.0
        %419 = vmatpush1.xpose.msra.mxu0 0.0
        %420 = vmatprep.subr.mxu0 0.0
        %421 = vmatpush1.xpose.msra.mxu0 0.0
        %422 = vmatprep.mubr.f32.mxu0 0.0
        %423 = vmatmul.mubr.f32.gmra.mrb[0].mxu0 %v352
        %v424 = vpop.f32.mrb[0].mxu0
        %v425 = vadd.f32 0.0, %v424
        %v426 = vpop.f32.mrb[0].mxu0
        %427 = vdwg.mxu0
        %428 = vrot.lane.b32.xlu0 %v239, 112
        %v429 = vpop.permute.xlu0 %428
        %430 = vrot.lane.b32.xlu0 %v244, 80
        %v431 = vpop.permute.xlu0 %430
        %432 = vrot.lane.b32.xlu0 %v249, 80
        %v433 = vpop.permute.xlu0 %432
        %v434 = vsel %vm268, %v429, 0
        %v436 = vsel %vm268, %v431, 0
        %v438 = vsel %vm268, %v433, 0
        %440 = vmatprep.subr.mxu0 0.0
        %441 = vmatpush1.xpose.msra.mxu0 %v436
        %442 = vmatprep.subr.mxu0 0.0
        %443 = vmatpush1.xpose.msra.mxu0 %v438
        %444 = vmatprep.subr.mxu0 0.0
        %445 = vmatpush1.xpose.msra.mxu0 0.0
        %446 = vmatprep.subr.mxu0 0.0
        %447 = vmatpush1.xpose.msra.mxu0 0.0
        %448 = vmatprep.subr.mxu0 0.0
        %449 = vmatpush1.xpose.msra.mxu0 0.0
        %450 = vmatprep.subr.mxu0 0.0
        %451 = vmatpush1.xpose.msra.mxu0 0.0
        %452 = vmatprep.subr.mxu0 0.0
        %453 = vmatpush1.xpose.msra.mxu0 0.0
        %454 = vmatprep.subr.mxu0 0.0
        %455 = vmatpush1.xpose.msra.mxu0 0.0
        %456 = vmatprep.subr.mxu0 0.0
        %457 = vmatpush1.xpose.msra.mxu0 0.0
        %458 = vmatprep.subr.mxu0 0.0
        %459 = vmatpush1.xpose.msra.mxu0 0.0
        %460 = vmatprep.subr.mxu0 0.0
        %461 = vmatpush1.xpose.msra.mxu0 0.0
        %462 = vmatprep.subr.mxu0 0.0
        %463 = vmatpush1.xpose.msra.mxu0 0.0
        %464 = vmatprep.subr.mxu0 0.0
        %465 = vmatpush1.xpose.msra.mxu0 0.0
        %466 = vmatprep.subr.mxu0 0.0
        %467 = vmatpush1.xpose.msra.mxu0 0.0
        %468 = vmatprep.subr.mxu0 0.0
        %469 = vmatpush1.xpose.msra.mxu0 0.0
        %470 = vmatprep.subr.mxu0 0.0
        %471 = vmatpush1.xpose.msra.mxu0 0.0
        %472 = vmatprep.subr.mxu0 0.0
        %473 = vmatpush1.xpose.msra.mxu0 0.0
        %474 = vmatprep.subr.mxu0 0.0
        %475 = vmatpush1.xpose.msra.mxu0 0.0
        %476 = vmatprep.subr.mxu0 0.0
        %477 = vmatpush1.xpose.msra.mxu0 0.0
        %478 = vmatprep.subr.mxu0 0.0
        %479 = vmatpush1.xpose.msra.mxu0 0.0
        %480 = vmatprep.subr.mxu0 0.0
        %481 = vmatpush1.xpose.msra.mxu0 0.0
        %482 = vmatprep.subr.mxu0 0.0
        %483 = vmatpush1.xpose.msra.mxu0 0.0
        %484 = vmatprep.subr.mxu0 0.0
        %485 = vmatpush1.xpose.msra.mxu0 0.0
        %486 = vmatprep.subr.mxu0 0.0
        %487 = vmatpush1.xpose.msra.mxu0 0.0
        %488 = vmatprep.subr.mxu0 0.0
        %489 = vmatpush1.xpose.msra.mxu0 0.0
        %490 = vmatprep.subr.mxu0 0.0
        %491 = vmatpush1.xpose.msra.mxu0 0.0
        %492 = vmatprep.subr.mxu0 0.0
        %493 = vmatpush1.xpose.msra.mxu0 0.0
        %494 = vmatprep.subr.mxu0 0.0
        %495 = vmatpush1.xpose.msra.mxu0 0.0
        %496 = vmatprep.subr.mxu0 0.0
        %497 = vmatpush1.xpose.msra.mxu0 0.0
        %498 = vmatprep.subr.mxu0 0.0
        %499 = vmatpush1.xpose.msra.mxu0 0.0
        %500 = vmatprep.subr.mxu0 0.0
        %501 = vmatpush1.xpose.msra.mxu0 0.0
        %502 = vmatprep.subr.mxu0 0.0
        %503 = vmatpush1.xpose.msra.mxu0 0.0
        %504 = vmatprep.mubr.f32.mxu0 0.0
        %505 = vmatmul.mubr.f32.gmra.mrb[0].mxu0 %v434
        %v506 = vpop.f32.mrb[0].mxu0
        %v507 = vadd.f32 0.0, %v506
        %v508 = vpop.f32.mrb[0].mxu0
        %509 = vdwg.mxu0
        %510 = vrot.lane.b32.xlu0 %v239, 104
        %v511 = vpop.permute.xlu0 %510
        %512 = vrot.lane.b32.xlu0 %v244, 72
        %v513 = vpop.permute.xlu0 %512
        %514 = vrot.lane.b32.xlu0 %v249, 72
        %v515 = vpop.permute.xlu0 %514
        %v516 = vsel %vm268, %v511, 0
        %v518 = vsel %vm268, %v513, 0
        %v520 = vsel %vm268, %v515, 0
        %522 = vmatprep.subr.mxu0 0.0
        %523 = vmatpush1.xpose.msra.mxu0 %v518
        %524 = vmatprep.subr.mxu0 0.0
        %525 = vmatpush1.xpose.msra.mxu0 %v520
        %526 = vmatprep.subr.mxu0 0.0
        %527 = vmatpush1.xpose.msra.mxu0 0.0
        %528 = vmatprep.subr.mxu0 0.0
        %529 = vmatpush1.xpose.msra.mxu0 0.0
        %530 = vmatprep.subr.mxu0 0.0
        %531 = vmatpush1.xpose.msra.mxu0 0.0
        %532 = vmatprep.subr.mxu0 0.0
        %533 = vmatpush1.xpose.msra.mxu0 0.0
        %534 = vmatprep.subr.mxu0 0.0
        %535 = vmatpush1.xpose.msra.mxu0 0.0
        %536 = vmatprep.subr.mxu0 0.0
        %537 = vmatpush1.xpose.msra.mxu0 0.0
        %538 = vmatprep.subr.mxu0 0.0
        %539 = vmatpush1.xpose.msra.mxu0 0.0
        %540 = vmatprep.subr.mxu0 0.0
        %541 = vmatpush1.xpose.msra.mxu0 0.0
        %542 = vmatprep.subr.mxu0 0.0
        %543 = vmatpush1.xpose.msra.mxu0 0.0
        %544 = vmatprep.subr.mxu0 0.0
        %545 = vmatpush1.xpose.msra.mxu0 0.0
        %546 = vmatprep.subr.mxu0 0.0
        %547 = vmatpush1.xpose.msra.mxu0 0.0
        %548 = vmatprep.subr.mxu0 0.0
        %549 = vmatpush1.xpose.msra.mxu0 0.0
        %550 = vmatprep.subr.mxu0 0.0
        %551 = vmatpush1.xpose.msra.mxu0 0.0
        %552 = vmatprep.subr.mxu0 0.0
        %553 = vmatpush1.xpose.msra.mxu0 0.0
        %554 = vmatprep.subr.mxu0 0.0
        %555 = vmatpush1.xpose.msra.mxu0 0.0
        %556 = vmatprep.subr.mxu0 0.0
        %557 = vmatpush1.xpose.msra.mxu0 0.0
        %558 = vmatprep.subr.mxu0 0.0
        %559 = vmatpush1.xpose.msra.mxu0 0.0
        %560 = vmatprep.subr.mxu0 0.0
        %561 = vmatpush1.xpose.msra.mxu0 0.0
        %562 = vmatprep.subr.mxu0 0.0
        %563 = vmatpush1.xpose.msra.mxu0 0.0
        %564 = vmatprep.subr.mxu0 0.0
        %565 = vmatpush1.xpose.msra.mxu0 0.0
        %566 = vmatprep.subr.mxu0 0.0
        %567 = vmatpush1.xpose.msra.mxu0 0.0
        %568 = vmatprep.subr.mxu0 0.0
        %569 = vmatpush1.xpose.msra.mxu0 0.0
        %570 = vmatprep.subr.mxu0 0.0
        %571 = vmatpush1.xpose.msra.mxu0 0.0
        %572 = vmatprep.subr.mxu0 0.0
        %573 = vmatpush1.xpose.msra.mxu0 0.0
        %574 = vmatprep.subr.mxu0 0.0
        %575 = vmatpush1.xpose.msra.mxu0 0.0
        %576 = vmatprep.subr.mxu0 0.0
        %577 = vmatpush1.xpose.msra.mxu0 0.0
        %578 = vmatprep.subr.mxu0 0.0
        %579 = vmatpush1.xpose.msra.mxu0 0.0
        %580 = vmatprep.subr.mxu0 0.0
        %581 = vmatpush1.xpose.msra.mxu0 0.0
        %582 = vmatprep.subr.mxu0 0.0
        %583 = vmatpush1.xpose.msra.mxu0 0.0
        %584 = vmatprep.subr.mxu0 0.0
        %585 = vmatpush1.xpose.msra.mxu0 0.0
        %586 = vmatprep.mubr.f32.mxu0 0.0
        %587 = vmatmul.mubr.f32.gmra.mrb[0].mxu0 %v516
        %v588 = vpop.f32.mrb[0].mxu0
        %v589 = vadd.f32 0.0, %v588
        %v590 = vpop.f32.mrb[0].mxu0
        %591 = vdwg.mxu0
        %vm592 = vcmask 130048
        %v593 = vsel %vm592, %v343, -inf
        %594 = vmax.xlane.f32.xlu0 %v593
        %v595 = vpop.xlane.xlu0 %594
        %v596 = vsel %vm592, %v425, -inf
        %597 = vmax.xlane.f32.xlu0 %v596
        %v598 = vpop.xlane.xlu0 %597
        %v599 = vsel %vm592, %v507, -inf
        %600 = vmax.xlane.f32.xlu0 %v599
        %v601 = vpop.xlane.xlu0 %600
        %v602 = vsel %vm592, %v589, -inf
        %603 = vmax.xlane.f32.xlu0 %v602
        %v604 = vpop.xlane.xlu0 %603
        %v605 = vsub.f32 %v343, %v595
        %v606 = vsub.f32 %v425, %v598
        %v607 = vsub.f32 %v507, %v601
        %v608 = vsub.f32 %v589, %v604
        %v609 = vmul.f32 %v605, 1.442695
        %v610 = vpow.pop %v609
        %v611 = vmul.f32 %v606, 1.442695
        %v612 = vpow.pop %v611
        %v613 = vmul.f32 %v607, 1.442695
        %v614 = vpow.pop %v613
        %v615 = vmul.f32 %v608, 1.442695
        %v616 = vpow.pop %v615
        %v617 = vsel %vm592, %v610, 0.0
        %618 = vadd.xlane.f32.xlu0 %v617
        %v619 = vpop.xlane.xlu0 %618
        %v620 = vsel %vm592, %v612, 0.0
        %621 = vadd.xlane.f32.xlu0 %v620
        %v622 = vpop.xlane.xlu0 %621
        %v623 = vsel %vm592, %v614, 0.0
        %624 = vadd.xlane.f32.xlu0 %v623
        %v625 = vpop.xlane.xlu0 %624
        %v626 = vsel %vm592, %v616, 0.0
        %627 = vadd.xlane.f32.xlu0 %v626
        %v628 = vpop.xlane.xlu0 %627
        %v629 = vrcp.pop %v619
        %v630 = vrcp.pop %v622
        %v631 = vrcp.pop %v625
        %v632 = vrcp.pop %v628
        %v633 = vmul.f32 %v610, %v629
        %v634 = vmul.f32 %v612, %v630
        %v635 = vmul.f32 %v614, %v631
        %v636 = vmul.f32 %v616, %v632
        %639 = vrot.lane.b32.xlu0 %v254, 64
        %v640 = vpop.permute.xlu0 %639
        %641 = vrot.lane.b32.xlu0 %v259, 64
        %v642 = vpop.permute.xlu0 %641
        %v646 = vsel %vm592, %v633, 0
        %648 = vmatprep.subr.mxu0 0.0
        %649 = vmatpush1.msra.mxu0 %v640
        %650 = vmatprep.subr.mxu0 0.0
        %651 = vmatpush1.msra.mxu0 %v642
        %652 = vmatprep.subr.mxu0 0.0
        %653 = vmatpush1.msra.mxu0 0.0
        %654 = vmatprep.subr.mxu0 0.0
        %655 = vmatpush1.msra.mxu0 0.0
        %656 = vmatprep.subr.mxu0 0.0
        %657 = vmatpush1.msra.mxu0 0.0
        %658 = vmatprep.subr.mxu0 0.0
        %659 = vmatpush1.msra.mxu0 0.0
        %660 = vmatprep.subr.mxu0 0.0
        %661 = vmatpush1.msra.mxu0 0.0
        %662 = vmatprep.subr.mxu0 0.0
        %663 = vmatpush1.msra.mxu0 0.0
        %664 = vmatprep.subr.mxu0 0.0
        %665 = vmatpush1.msra.mxu0 0.0
        %666 = vmatprep.subr.mxu0 0.0
        %667 = vmatpush1.msra.mxu0 0.0
        %668 = vmatprep.subr.mxu0 0.0
        %669 = vmatpush1.msra.mxu0 0.0
        %670 = vmatprep.subr.mxu0 0.0
        %671 = vmatpush1.msra.mxu0 0.0
        %672 = vmatprep.subr.mxu0 0.0
        %673 = vmatpush1.msra.mxu0 0.0
        %674 = vmatprep.subr.mxu0 0.0
        %675 = vmatpush1.msra.mxu0 0.0
        %676 = vmatprep.subr.mxu0 0.0
        %677 = vmatpush1.msra.mxu0 0.0
        %678 = vmatprep.subr.mxu0 0.0
        %679 = vmatpush1.msra.mxu0 0.0
        %680 = vmatprep.subr.mxu0 0.0
        %681 = vmatpush1.msra.mxu0 0.0
        %682 = vmatprep.subr.mxu0 0.0
        %683 = vmatpush1.msra.mxu0 0.0
        %684 = vmatprep.subr.mxu0 0.0
        %685 = vmatpush1.msra.mxu0 0.0
        %686 = vmatprep.subr.mxu0 0.0
        %687 = vmatpush1.msra.mxu0 0.0
        %688 = vmatprep.subr.mxu0 0.0
        %689 = vmatpush1.msra.mxu0 0.0
        %690 = vmatprep.subr.mxu0 0.0
        %691 = vmatpush1.msra.mxu0 0.0
        %692 = vmatprep.subr.mxu0 0.0
        %693 = vmatpush1.msra.mxu0 0.0
        %694 = vmatprep.subr.mxu0 0.0
        %695 = vmatpush1.msra.mxu0 0.0
        %696 = vmatprep.subr.mxu0 0.0
        %697 = vmatpush1.msra.mxu0 0.0
        %698 = vmatprep.subr.mxu0 0.0
        %699 = vmatpush1.msra.mxu0 0.0
        %700 = vmatprep.subr.mxu0 0.0
        %701 = vmatpush1.msra.mxu0 0.0
        %702 = vmatprep.subr.mxu0 0.0
        %703 = vmatpush1.msra.mxu0 0.0
        %704 = vmatprep.subr.mxu0 0.0
        %705 = vmatpush1.msra.mxu0 0.0
        %706 = vmatprep.subr.mxu0 0.0
        %707 = vmatpush1.msra.mxu0 0.0
        %708 = vmatprep.subr.mxu0 0.0
        %709 = vmatpush1.msra.mxu0 0.0
        %710 = vmatprep.subr.mxu0 0.0
        %711 = vmatpush1.msra.mxu0 0.0
        %712 = vmatprep.mubr.f32.mxu0 0.0
        %713 = vmatmul.mubr.f32.gmra.mrb[0].mxu0 %v646
        %v714 = vpop.f32.mrb[0].mxu0
        %v715 = vadd.f32 0.0, %v714
        %v716 = vpop.f32.mrb[0].mxu0
        %717 = vdwg.mxu0
        %718 = vrot.lane.b32.xlu0 %v254, 56
        %v719 = vpop.permute.xlu0 %718
        %720 = vrot.lane.b32.xlu0 %v259, 56
        %v721 = vpop.permute.xlu0 %720
        %v725 = vsel %vm592, %v634, 0
        %727 = vmatprep.subr.mxu0 0.0
        %728 = vmatpush1.msra.mxu0 %v719
        %729 = vmatprep.subr.mxu0 0.0
        %730 = vmatpush1.msra.mxu0 %v721
        %731 = vmatprep.subr.mxu0 0.0
        %732 = vmatpush1.msra.mxu0 0.0
        %733 = vmatprep.subr.mxu0 0.0
        %734 = vmatpush1.msra.mxu0 0.0
        %735 = vmatprep.subr.mxu0 0.0
        %736 = vmatpush1.msra.mxu0 0.0
        %737 = vmatprep.subr.mxu0 0.0
        %738 = vmatpush1.msra.mxu0 0.0
        %739 = vmatprep.subr.mxu0 0.0
        %740 = vmatpush1.msra.mxu0 0.0
        %741 = vmatprep.subr.mxu0 0.0
        %742 = vmatpush1.msra.mxu0 0.0
        %743 = vmatprep.subr.mxu0 0.0
        %744 = vmatpush1.msra.mxu0 0.0
        %745 = vmatprep.subr.mxu0 0.0
        %746 = vmatpush1.msra.mxu0 0.0
        %747 = vmatprep.subr.mxu0 0.0
        %748 = vmatpush1.msra.mxu0 0.0
        %749 = vmatprep.subr.mxu0 0.0
        %750 = vmatpush1.msra.mxu0 0.0
        %751 = vmatprep.subr.mxu0 0.0
        %752 = vmatpush1.msra.mxu0 0.0
        %753 = vmatprep.subr.mxu0 0.0
        %754 = vmatpush1.msra.mxu0 0.0
        %755 = vmatprep.subr.mxu0 0.0
        %756 = vmatpush1.msra.mxu0 0.0
        %757 = vmatprep.subr.mxu0 0.0
        %758 = vmatpush1.msra.mxu0 0.0
        %759 = vmatprep.subr.mxu0 0.0
        %760 = vmatpush1.msra.mxu0 0.0
        %761 = vmatprep.subr.mxu0 0.0
        %762 = vmatpush1.msra.mxu0 0.0
        %763 = vmatprep.subr.mxu0 0.0
        %764 = vmatpush1.msra.mxu0 0.0
        %765 = vmatprep.subr.mxu0 0.0
        %766 = vmatpush1.msra.mxu0 0.0
        %767 = vmatprep.subr.mxu0 0.0
        %768 = vmatpush1.msra.mxu0 0.0
        %769 = vmatprep.subr.mxu0 0.0
        %770 = vmatpush1.msra.mxu0 0.0
        %771 = vmatprep.subr.mxu0 0.0
        %772 = vmatpush1.msra.mxu0 0.0
        %773 = vmatprep.subr.mxu0 0.0
        %774 = vmatpush1.msra.mxu0 0.0
        %775 = vmatprep.subr.mxu0 0.0
        %776 = vmatpush1.msra.mxu0 0.0
        %777 = vmatprep.subr.mxu0 0.0
        %778 = vmatpush1.msra.mxu0 0.0
        %779 = vmatprep.subr.mxu0 0.0
        %780 = vmatpush1.msra.mxu0 0.0
        %781 = vmatprep.subr.mxu0 0.0
        %782 = vmatpush1.msra.mxu0 0.0
        %783 = vmatprep.subr.mxu0 0.0
        %784 = vmatpush1.msra.mxu0 0.0
        %785 = vmatprep.subr.mxu0 0.0
        %786 = vmatpush1.msra.mxu0 0.0
        %787 = vmatprep.subr.mxu0 0.0
        %788 = vmatpush1.msra.mxu0 0.0
        %789 = vmatprep.subr.mxu0 0.0
        %790 = vmatpush1.msra.mxu0 0.0
        %791 = vmatprep.mubr.f32.mxu0 0.0
        %792 = vmatmul.mubr.f32.gmra.mrb[0].mxu0 %v725
        %v793 = vpop.f32.mrb[0].mxu0
        %v794 = vadd.f32 0.0, %v793
        %v795 = vpop.f32.mrb[0].mxu0
        %796 = vdwg.mxu0
        %797 = vrot.lane.b32.xlu0 %v254, 48
        %v798 = vpop.permute.xlu0 %797
        %799 = vrot.lane.b32.xlu0 %v259, 48
        %v800 = vpop.permute.xlu0 %799
        %v804 = vsel %vm592, %v635, 0
        %806 = vmatprep.subr.mxu0 0.0
        %807 = vmatpush1.msra.mxu0 %v798
        %808 = vmatprep.subr.mxu0 0.0
        %809 = vmatpush1.msra.mxu0 %v800
        %810 = vmatprep.subr.mxu0 0.0
        %811 = vmatpush1.msra.mxu0 0.0
        %812 = vmatprep.subr.mxu0 0.0
        %813 = vmatpush1.msra.mxu0 0.0
        %814 = vmatprep.subr.mxu0 0.0
        %815 = vmatpush1.msra.mxu0 0.0
        %816 = vmatprep.subr.mxu0 0.0
        %817 = vmatpush1.msra.mxu0 0.0
        %818 = vmatprep.subr.mxu0 0.0
        %819 = vmatpush1.msra.mxu0 0.0
        %820 = vmatprep.subr.mxu0 0.0
        %821 = vmatpush1.msra.mxu0 0.0
        %822 = vmatprep.subr.mxu0 0.0
        %823 = vmatpush1.msra.mxu0 0.0
        %824 = vmatprep.subr.mxu0 0.0
        %825 = vmatpush1.msra.mxu0 0.0
        %826 = vmatprep.subr.mxu0 0.0
        %827 = vmatpush1.msra.mxu0 0.0
        %828 = vmatprep.subr.mxu0 0.0
        %829 = vmatpush1.msra.mxu0 0.0
        %830 = vmatprep.subr.mxu0 0.0
        %831 = vmatpush1.msra.mxu0 0.0
        %832 = vmatprep.subr.mxu0 0.0
        %833 = vmatpush1.msra.mxu0 0.0
        %834 = vmatprep.subr.mxu0 0.0
        %835 = vmatpush1.msra.mxu0 0.0
        %836 = vmatprep.subr.mxu0 0.0
        %837 = vmatpush1.msra.mxu0 0.0
        %838 = vmatprep.subr.mxu0 0.0
        %839 = vmatpush1.msra.mxu0 0.0
        %840 = vmatprep.subr.mxu0 0.0
        %841 = vmatpush1.msra.mxu0 0.0
        %842 = vmatprep.subr.mxu0 0.0
        %843 = vmatpush1.msra.mxu0 0.0
        %844 = vmatprep.subr.mxu0 0.0
        %845 = vmatpush1.msra.mxu0 0.0
        %846 = vmatprep.subr.mxu0 0.0
        %847 = vmatpush1.msra.mxu0 0.0
        %848 = vmatprep.subr.mxu0 0.0
        %849 = vmatpush1.msra.mxu0 0.0
        %850 = vmatprep.subr.mxu0 0.0
        %851 = vmatpush1.msra.mxu0 0.0
        %852 = vmatprep.subr.mxu0 0.0
        %853 = vmatpush1.msra.mxu0 0.0
        %854 = vmatprep.subr.mxu0 0.0
        %855 = vmatpush1.msra.mxu0 0.0
        %856 = vmatprep.subr.mxu0 0.0
        %857 = vmatpush1.msra.mxu0 0.0
        %858 = vmatprep.subr.mxu0 0.0
        %859 = vmatpush1.msra.mxu0 0.0
        %860 = vmatprep.subr.mxu0 0.0
        %861 = vmatpush1.msra.mxu0 0.0
        %862 = vmatprep.subr.mxu0 0.0
        %863 = vmatpush1.msra.mxu0 0.0
        %864 = vmatprep.subr.mxu0 0.0
        %865 = vmatpush1.msra.mxu0 0.0
        %866 = vmatprep.subr.mxu0 0.0
        %867 = vmatpush1.msra.mxu0 0.0
        %868 = vmatprep.subr.mxu0 0.0
        %869 = vmatpush1.msra.mxu0 0.0
        %870 = vmatprep.mubr.f32.mxu0 0.0
        %871 = vmatmul.mubr.f32.gmra.mrb[0].mxu0 %v804
        %v872 = vpop.f32.mrb[0].mxu0
        %v873 = vadd.f32 0.0, %v872
        %v874 = vpop.f32.mrb[0].mxu0
        %875 = vdwg.mxu0
        %876 = vrot.lane.b32.xlu0 %v254, 40
        %v877 = vpop.permute.xlu0 %876
        %878 = vrot.lane.b32.xlu0 %v259, 40
        %v879 = vpop.permute.xlu0 %878
        %v883 = vsel %vm592, %v636, 0
        %885 = vmatprep.subr.mxu0 0.0
        %886 = vmatpush1.msra.mxu0 %v877
        %887 = vmatprep.subr.mxu0 0.0
        %888 = vmatpush1.msra.mxu0 %v879
        %889 = vmatprep.subr.mxu0 0.0
        %890 = vmatpush1.msra.mxu0 0.0
        %891 = vmatprep.subr.mxu0 0.0
        %892 = vmatpush1.msra.mxu0 0.0
        %893 = vmatprep.subr.mxu0 0.0
        %894 = vmatpush1.msra.mxu0 0.0
        %895 = vmatprep.subr.mxu0 0.0
        %896 = vmatpush1.msra.mxu0 0.0
        %897 = vmatprep.subr.mxu0 0.0
        %898 = vmatpush1.msra.mxu0 0.0
        %899 = vmatprep.subr.mxu0 0.0
        %900 = vmatpush1.msra.mxu0 0.0
        %901 = vmatprep.subr.mxu0 0.0
        %902 = vmatpush1.msra.mxu0 0.0
        %903 = vmatprep.subr.mxu0 0.0
        %904 = vmatpush1.msra.mxu0 0.0
        %905 = vmatprep.subr.mxu0 0.0
        %906 = vmatpush1.msra.mxu0 0.0
        %907 = vmatprep.subr.mxu0 0.0
        %908 = vmatpush1.msra.mxu0 0.0
        %909 = vmatprep.subr.mxu0 0.0
        %910 = vmatpush1.msra.mxu0 0.0
        %911 = vmatprep.subr.mxu0 0.0
        %912 = vmatpush1.msra.mxu0 0.0
        %913 = vmatprep.subr.mxu0 0.0
        %914 = vmatpush1.msra.mxu0 0.0
        %915 = vmatprep.subr.mxu0 0.0
        %916 = vmatpush1.msra.mxu0 0.0
        %917 = vmatprep.subr.mxu0 0.0
        %918 = vmatpush1.msra.mxu0 0.0
        %919 = vmatprep.subr.mxu0 0.0
        %920 = vmatpush1.msra.mxu0 0.0
        %921 = vmatprep.subr.mxu0 0.0
        %922 = vmatpush1.msra.mxu0 0.0
        %923 = vmatprep.subr.mxu0 0.0
        %924 = vmatpush1.msra.mxu0 0.0
        %925 = vmatprep.subr.mxu0 0.0
        %926 = vmatpush1.msra.mxu0 0.0
        %927 = vmatprep.subr.mxu0 0.0
        %928 = vmatpush1.msra.mxu0 0.0
        %929 = vmatprep.subr.mxu0 0.0
        %930 = vmatpush1.msra.mxu0 0.0
        %931 = vmatprep.subr.mxu0 0.0
        %932 = vmatpush1.msra.mxu0 0.0
        %933 = vmatprep.subr.mxu0 0.0
        %934 = vmatpush1.msra.mxu0 0.0
        %935 = vmatprep.subr.mxu0 0.0
        %936 = vmatpush1.msra.mxu0 0.0
        %937 = vmatprep.subr.mxu0 0.0
        %938 = vmatpush1.msra.mxu0 0.0
        %939 = vmatprep.subr.mxu0 0.0
        %940 = vmatpush1.msra.mxu0 0.0
        %941 = vmatprep.subr.mxu0 0.0
        %942 = vmatpush1.msra.mxu0 0.0
        %943 = vmatprep.subr.mxu0 0.0
        %944 = vmatpush1.msra.mxu0 0.0
        %945 = vmatprep.subr.mxu0 0.0
        %946 = vmatpush1.msra.mxu0 0.0
        %947 = vmatprep.subr.mxu0 0.0
        %948 = vmatpush1.msra.mxu0 0.0
        %949 = vmatprep.mubr.f32.mxu0 0.0
        %950 = vmatmul.mubr.f32.gmra.mrb[0].mxu0 %v883
        %v951 = vpop.f32.mrb[0].mxu0
        %v952 = vadd.f32 0.0, %v951
        %v953 = vpop.f32.mrb[0].mxu0
        %954 = vdwg.mxu0
        %956 = vrot.lane.b32.xlu0 %v794, 8
        %v957 = vpop.permute.xlu0 %956
        %960 = vrot.lane.b32.xlu0 %v873, 16
        %v961 = vpop.permute.xlu0 %960
        %964 = vrot.lane.b32.xlu0 %v952, 24
        %v965 = vpop.permute.xlu0 %964
        %v967 = vsel %vm268, %v715, %v957
        %v968 = vsel %vm592, %v967, %v961
        %vm969 = vcmask 195584
        %v970 = vsel %vm969, %v968, %v965
        %v971 = vld [vmem:[%s1 + $0x81] sm:$0x1]
        %v972 = vlaneseq
        %v973 = vshrl.u32 %v972, 7
        %v974 = vsub.s32 0, %v973
        %v975 = vrot.slane %v971, %v974
        %980 = vrot.lane.b32.xlu0 %v147, 32
        %v981 = vpop.permute.xlu0 %980
        %982 = vrot.lane.b32.xlu0 %v148, 32
        %v983 = vpop.permute.xlu0 %982
        %984 = vrot.lane.b32.xlu0 %v149, 32
        %v985 = vpop.permute.xlu0 %984
        %986 = vrot.lane.b32.xlu0 %v150, 32
        %v987 = vpop.permute.xlu0 %986
        %v993 = vsel %vm156, %v970, 0
        %995 = vmatprep.subr.mxu0 0.0
        %996 = vmatpush1.msra.mxu0 %v981
        %997 = vmatprep.subr.mxu0 0.0
        %998 = vmatpush1.msra.mxu0 %v983
        %999 = vmatprep.subr.mxu0 0.0
        %1000 = vmatpush1.msra.mxu0 %v985
        %1001 = vmatprep.subr.mxu0 0.0
        %1002 = vmatpush1.msra.mxu0 %v987
        %1003 = vmatprep.subr.mxu0 0.0
        %1004 = vmatpush1.msra.mxu0 0.0
        %1005 = vmatprep.subr.mxu0 0.0
        %1006 = vmatpush1.msra.mxu0 0.0
        %1007 = vmatprep.subr.mxu0 0.0
        %1008 = vmatpush1.msra.mxu0 0.0
        %1009 = vmatprep.subr.mxu0 0.0
        %1010 = vmatpush1.msra.mxu0 0.0
        %1011 = vmatprep.subr.mxu0 0.0
        %1012 = vmatpush1.msra.mxu0 0.0
        %1013 = vmatprep.subr.mxu0 0.0
        %1014 = vmatpush1.msra.mxu0 0.0
        %1015 = vmatprep.subr.mxu0 0.0
        %1016 = vmatpush1.msra.mxu0 0.0
        %1017 = vmatprep.subr.mxu0 0.0
        %1018 = vmatpush1.msra.mxu0 0.0
        %1019 = vmatprep.subr.mxu0 0.0
        %1020 = vmatpush1.msra.mxu0 0.0
        %1021 = vmatprep.subr.mxu0 0.0
        %1022 = vmatpush1.msra.mxu0 0.0
        %1023 = vmatprep.subr.mxu0 0.0
        %1024 = vmatpush1.msra.mxu0 0.0
        %1025 = vmatprep.subr.mxu0 0.0
        %1026 = vmatpush1.msra.mxu0 0.0
        %1027 = vmatprep.subr.mxu0 0.0
        %1028 = vmatpush1.msra.mxu0 0.0
        %1029 = vmatprep.subr.mxu0 0.0
        %1030 = vmatpush1.msra.mxu0 0.0
        %1031 = vmatprep.subr.mxu0 0.0
        %1032 = vmatpush1.msra.mxu0 0.0
        %1033 = vmatprep.subr.mxu0 0.0
        %1034 = vmatpush1.msra.mxu0 0.0
        %1035 = vmatprep.subr.mxu0 0.0
        %1036 = vmatpush1.msra.mxu0 0.0
        %1037 = vmatprep.subr.mxu0 0.0
        %1038 = vmatpush1.msra.mxu0 0.0
        %1039 = vmatprep.subr.mxu0 0.0
        %1040 = vmatpush1.msra.mxu0 0.0
        %1041 = vmatprep.subr.mxu0 0.0
        %1042 = vmatpush1.msra.mxu0 0.0
        %1043 = vmatprep.subr.mxu0 0.0
        %1044 = vmatpush1.msra.mxu0 0.0
        %1045 = vmatprep.subr.mxu0 0.0
        %1046 = vmatpush1.msra.mxu0 0.0
        %1047 = vmatprep.subr.mxu0 0.0
        %1048 = vmatpush1.msra.mxu0 0.0
        %1049 = vmatprep.subr.mxu0 0.0
        %1050 = vmatpush1.msra.mxu0 0.0
        %1051 = vmatprep.subr.mxu0 0.0
        %1052 = vmatpush1.msra.mxu0 0.0
        %1053 = vmatprep.subr.mxu0 0.0
        %1054 = vmatpush1.msra.mxu0 0.0
        %1055 = vmatprep.subr.mxu0 0.0
        %1056 = vmatpush1.msra.mxu0 0.0
        %1057 = vmatprep.subr.mxu0 0.0
        %1058 = vmatpush1.msra.mxu0 0.0
        %1059 = vmatprep.mubr.f32.mxu0 0.0
        %1060 = vmatmul.mubr.f32.gmra.mrb[0].mxu0 %v993
        %v1061 = vpop.f32.mrb[0].mxu0
        %v1062 = vadd.f32 %v975, %v1061
        %v1063 = vpop.f32.mrb[0].mxu0
        %1064 = vdwg.mxu0
        %v1065 = vadd.f32 %v1062, %v142
        %v1066 = vsel %vm156, %v1065, 0.0
        %1067 = vadd.xlane.f32.xlu0 %v1066
        %v1068 = vpop.xlane.xlu0 %1067
        %v1069 = vrcp.pop 32.0
        %v1070 = vmul.f32 %v1068, %v1069
        %v1071 = vsub.f32 %v1065, %v1070
        %v1072 = vmul.f32 %v1071, %v1071
        %v1073 = vsel %vm156, %v1072, 0.0
        %1074 = vadd.xlane.f32.xlu0 %v1073
        %v1075 = vpop.xlane.xlu0 %1074
        %v1076 = vmul.f32 %v1075, %v1069
        %v1077 = vadd.f32 %v1076, 1e-05
        %v1078 = vrsqrt.pop %v1077
        %v1079 = vmul.f32 %v1071, %v1078
        %v1080 = vld [vmem:[%s1 + $0x84] sm:$0x1]
        %v1081 = vlaneseq
        %v1082 = vshrl.u32 %v1081, 7
        %v1083 = vsub.s32 0, %v1082
        %v1084 = vrot.slane %v1080, %v1083
        %v1085 = vmul.f32 %v1079, %v1084
        %v1086 = vld [vmem:[%s1 + $0x85] sm:$0x1]
        %v1087 = vlaneseq
        %v1088 = vshrl.u32 %v1087, 7
        %v1089 = vsub.s32 0, %v1088
        %v1090 = vrot.slane %v1086, %v1089
        %v1091 = vadd.f32 %v1085, %v1090
        %v1092 = vld [vmem:[%s1 + $0x20] sm:$0xff]
        %v1093 = vld [vmem:[%s1 + $0x28] sm:$0xff]
        %v1094 = vld [vmem:[%s1 + $0x30] sm:$0xff]
        %v1095 = vld [vmem:[%s1 + $0x38] sm:$0xff]
        %v1096 = vld [vmem:[%s1 + $0x40] sm:$0xff]
        %v1097 = vld [vmem:[%s1 + $0x48] sm:$0xff]
        %v1098 = vld [vmem:[%s1 + $0x50] sm:$0xff]
        %v1099 = vld [vmem:[%s1 + $0x58] sm:$0xff]
        %v1100 = vld [vmem:[%s1 + $0x60] sm:$0xff]
        %v1101 = vld [vmem:[%s1 + $0x68] sm:$0xff]
        %v1102 = vld [vmem:[%s1 + $0x70] sm:$0xff]
        %v1103 = vld [vmem:[%s1 + $0x78] sm:$0xff]
        %v1104 = vld [vmem:[%s1 + $0x82] sm:$0x1]
        %v1105 = vlaneseq
        %v1106 = vshrl.u32 %v1105, 7
        %v1107 = vsub.s32 0, %v1106
        %v1108 = vrot.slane %v1104, %v1107
        %v1110 = vsel %vm156, %v1091, 0
        %1112 = vmatprep.subr.mxu0 0.0
        %1113 = vmatpush1.msra.mxu0 %v1092
        %1114 = vmatprep.subr.mxu0 0.0
        %1115 = vmatpush1.msra.mxu0 %v1093
        %1116 = vmatprep.subr.mxu0 0.0
        %1117 = vmatpush1.msra.mxu0 %v1094
        %1118 = vmatprep.subr.mxu0 0.0
        %1119 = vmatpush1.msra.mxu0 %v1095
        %1120 = vmatprep.subr.mxu0 0.0
        %1121 = vmatpush1.msra.mxu0 0.0
        %1122 = vmatprep.subr.mxu0 0.0
        %1123 = vmatpush1.msra.mxu0 0.0
        %1124 = vmatprep.subr.mxu0 0.0
        %1125 = vmatpush1.msra.mxu0 0.0
        %1126 = vmatprep.subr.mxu0 0.0
        %1127 = vmatpush1.msra.mxu0 0.0
        %1128 = vmatprep.subr.mxu0 0.0
        %1129 = vmatpush1.msra.mxu0 0.0
        %1130 = vmatprep.subr.mxu0 0.0
        %1131 = vmatpush1.msra.mxu0 0.0
        %1132 = vmatprep.subr.mxu0 0.0
        %1133 = vmatpush1.msra.mxu0 0.0
        %1134 = vmatprep.subr.mxu0 0.0
        %1135 = vmatpush1.msra.mxu0 0.0
        %1136 = vmatprep.subr.mxu0 0.0
        %1137 = vmatpush1.msra.mxu0 0.0
        %1138 = vmatprep.subr.mxu0 0.0
        %1139 = vmatpush1.msra.mxu0 0.0
        %1140 = vmatprep.subr.mxu0 0.0
        %1141 = vmatpush1.msra.mxu0 0.0
        %1142 = vmatprep.subr.mxu0 0.0
        %1143 = vmatpush1.msra.mxu0 0.0
        %1144 = vmatprep.subr.mxu0 0.0
        %1145 = vmatpush1.msra.mxu0 0.0
        %1146 = vmatprep.subr.mxu0 0.0
        %1147 = vmatpush1.msra.mxu0 0.0
        %1148 = vmatprep.subr.mxu0 0.0
        %1149 = vmatpush1.msra.mxu0 0.0
        %1150 = vmatprep.subr.mxu0 0.0
        %1151 = vmatpush1.msra.mxu0 0.0
        %1152 = vmatprep.subr.mxu0 0.0
        %1153 = vmatpush1.msra.mxu0 0.0
        %1154 = vmatprep.subr.mxu0 0.0
        %1155 = vmatpush1.msra.mxu0 0.0
        %1156 = vmatprep.subr.mxu0 0.0
        %1157 = vmatpush1.msra.mxu0 0.0
        %1158 = vmatprep.subr.mxu0 0.0
        %1159 = vmatpush1.msra.mxu0 0.0
        %1160 = vmatprep.subr.mxu0 0.0
        %1161 = vmatpush1.msra.mxu0 0.0
        %1162 = vmatprep.subr.mxu0 0.0
        %1163 = vmatpush1.msra.mxu0 0.0
        %1164 = vmatprep.subr.mxu0 0.0
        %1165 = vmatpush1.msra.mxu0 0.0
        %1166 = vmatprep.subr.mxu0 0.0
        %1167 = vmatpush1.msra.mxu0 0.0
        %1168 = vmatprep.subr.mxu0 0.0
        %1169 = vmatpush1.msra.mxu0 0.0
        %1170 = vmatprep.subr.mxu0 0.0
        %1171 = vmatpush1.msra.mxu0 0.0
        %1172 = vmatprep.subr.mxu0 0.0
        %1173 = vmatpush1.msra.mxu0 0.0
        %1174 = vmatprep.subr.mxu0 0.0
        %1175 = vmatpush1.msra.mxu0 0.0
        %1176 = vmatprep.mubr.f32.mxu0 0.0
        %1177 = vmatmul.mubr.f32.gmra.mrb[0].mxu0 %v1110
        %v1178 = vpop.f32.mrb[0].mxu0
        %v1179 = vadd.f32 %v1108, %v1178
        %v1180 = vpop.f32.mrb[0].mxu0
        %1181 = vdwg.mxu0
        %v1182 = vmax.f32 %v1179, 0.0
        %v1183 = vld [vmem:[%s1 + $0x83] sm:$0x1]
        %v1184 = vlaneseq
        %v1185 = vshrl.u32 %v1184, 7
        %v1186 = vsub.s32 0, %v1185
        %v1187 = vrot.slane %v1183, %v1186
        %vm1188 = vcmask 523264
        %v1190 = vsel %vm1188, %v1182, 0
        %1192 = vmatprep.subr.mxu0 0.0
        %1193 = vmatpush1.msra.mxu0 %v1096
        %1194 = vmatprep.subr.mxu0 0.0
        %1195 = vmatpush1.msra.mxu0 %v1097
        %1196 = vmatprep.subr.mxu0 0.0
        %1197 = vmatpush1.msra.mxu0 %v1098
        %1198 = vmatprep.subr.mxu0 0.0
        %1199 = vmatpush1.msra.mxu0 %v1099
        %1200 = vmatprep.subr.mxu0 0.0
        %1201 = vmatpush1.msra.mxu0 %v1100
        %1202 = vmatprep.subr.mxu0 0.0
        %1203 = vmatpush1.msra.mxu0 %v1101
        %1204 = vmatprep.subr.mxu0 0.0
        %1205 = vmatpush1.msra.mxu0 %v1102
        %1206 = vmatprep.subr.mxu0 0.0
        %1207 = vmatpush1.msra.mxu0 %v1103
        %1208 = vmatprep.subr.mxu0 0.0
        %1209 = vmatpush1.msra.mxu0 0.0
        %1210 = vmatprep.subr.mxu0 0.0
        %1211 = vmatpush1.msra.mxu0 0.0
        %1212 = vmatprep.subr.mxu0 0.0
        %1213 = vmatpush1.msra.mxu0 0.0
        %1214 = vmatprep.subr.mxu0 0.0
        %1215 = vmatpush1.msra.mxu0 0.0
        %1216 = vmatprep.subr.mxu0 0.0
        %1217 = vmatpush1.msra.mxu0 0.0
        %1218 = vmatprep.subr.mxu0 0.0
        %1219 = vmatpush1.msra.mxu0 0.0
        %1220 = vmatprep.subr.mxu0 0.0
        %1221 = vmatpush1.msra.mxu0 0.0
        %1222 = vmatprep.subr.mxu0 0.0
        %1223 = vmatpush1.msra.mxu0 0.0
        %1224 = vmatprep.subr.mxu0 0.0
        %1225 = vmatpush1.msra.mxu0 0.0
        %1226 = vmatprep.subr.mxu0 0.0
        %1227 = vmatpush1.msra.mxu0 0.0
        %1228 = vmatprep.subr.mxu0 0.0
        %1229 = vmatpush1.msra.mxu0 0.0
        %1230 = vmatprep.subr.mxu0 0.0
        %1231 = vmatpush1.msra.mxu0 0.0
        %1232 = vmatprep.subr.mxu0 0.0
        %1233 = vmatpush1.msra.mxu0 0.0
        %1234 = vmatprep.subr.mxu0 0.0
        %1235 = vmatpush1.msra.mxu0 0.0
        %1236 = vmatprep.subr.mxu0 0.0
        %1237 = vmatpush1.msra.mxu0 0.0
        %1238 = vmatprep.subr.mxu0 0.0
        %1239 = vmatpush1.msra.mxu0 0.0
        %1240 = vmatprep.subr.mxu0 0.0
        %1241 = vmatpush1.msra.mxu0 0.0
        %1242 = vmatprep.subr.mxu0 0.0
        %1243 = vmatpush1.msra.mxu0 0.0
        %1244 = vmatprep.subr.mxu0 0.0
        %1245 = vmatpush1.msra.mxu0 0.0
        %1246 = vmatprep.subr.mxu0 0.0
        %1247 = vmatpush1.msra.mxu0 0.0
        %1248 = vmatprep.subr.mxu0 0.0
        %1249 = vmatpush1.msra.mxu0 0.0
        %1250 = vmatprep.subr.mxu0 0.0
        %1251 = vmatpush1.msra.mxu0 0.0
        %1252 = vmatprep.subr.mxu0 0.0
        %1253 = vmatpush1.msra.mxu0 0.0
        %1254 = vmatprep.subr.mxu0 0.0
        %1255 = vmatpush1.msra.mxu0 0.0
        %1256 = vmatprep.mubr.f32.mxu0 0.0
        %1257 = vmatmul.mubr.f32.gmra.mrb[0].mxu0 %v1190
        %v1258 = vpop.f32.mrb[0].mxu0
        %v1259 = vadd.f32 %v1187, %v1258
        %v1260 = vpop.f32.mrb[0].mxu0
        %1261 = vdwg.mxu0
        %v1262 = vadd.f32 %v1091, %v1259
        %v1263 = vsel %vm156, %v1262, 0.0
        %1264 = vadd.xlane.f32.xlu0 %v1263
        %v1265 = vpop.xlane.xlu0 %1264
        %v1266 = vmul.f32 %v1265, %v1069
        %v1267 = vsub.f32 %v1262, %v1266
        %v1268 = vmul.f32 %v1267, %v1267
        %v1269 = vsel %vm156, %v1268, 0.0
        %1270 = vadd.xlane.f32.xlu0 %v1269
        %v1271 = vpop.xlane.xlu0 %1270
        %v1272 = vmul.f32 %v1271, %v1069
        %v1273 = vadd.f32 %v1272, 1e-05
        %v1274 = vrsqrt.pop %v1273
        %v1275 = vmul.f32 %v1267, %v1274
        %v1276 = vld [vmem:[%s1 + $0x86] sm:$0x1]
        %v1277 = vlaneseq
        %v1278 = vshrl.u32 %v1277, 7
        %v1279 = vsub.s32 0, %v1278
        %v1280 = vrot.slane %v1276, %v1279
        %v1281 = vmul.f32 %v1275, %v1280
        %v1282 = vld [vmem:[%s1 + $0x87] sm:$0x1]
        %v1283 = vlaneseq
        %v1284 = vshrl.u32 %v1283, 7
        %v1285 = vsub.s32 0, %v1284
        %v1286 = vrot.slane %v1282, %v1285
        %v1287 = vadd.f32 %v1281, %v1286
        %1288 = vst.msk [vmem:[%s136] sm:$0xff] %vm156, %v1287
        %s1289 = sand.u32 %s71, 1
        %s1290 = scalar_lea.sflag [#allocation3], %s1289
        %s1291 = sand.u32 %s71, 1
        %s1292 = smul.addr %s1291, 8
        %s1293 = scalar_lea.vmem [#allocation2], %s1292
        // Predicated region
        $region29: #{tpu_custom_call.1} parent=27 // pred_check
          %p1294 = pneg %p81
        $region30: #{tpu_custom_call.1} parent=27 // pred_check_branch
          %1296 = sbr.rel (%p1294) target = $region32
        $region31: #{tpu_custom_call.1} parent=27 // pred_region
          %s1298 = ssub.s32 128, 128
          %1299 = vsyncadd %s1290, %s1298
          %s1300 = smul.addr %s16, 128
          %s1301 = scalar_lea.hbm %s2, %s1300
          %s1303 = sshll.u32 %s1293, 4
          %s1304 = int_to_ptr.vmem [resolvable:$true] %s1303
          %1306 = dma.vmem_to_hbm [thread:$0]  %s1304, 128, %s1301, %s1290
        $region32: #{tpu_custom_call.1} parent=27 // pred_fallthru
          _
      $region28: #{tpu_custom_call.1} parent=5 // pred_fallthru
        _
      %p1307 = scmp.le.s32.totalorder 2, %s11
      // Predicated region
      $region33: #{tpu_custom_call.1} parent=5 // pred_check
        %p1308 = pneg %p1307
      $region34: #{tpu_custom_call.1} parent=5 // pred_check_branch
        %1310 = sbr.rel (%p1308) target = $region36
      $region35: #{tpu_custom_call.1} parent=5 // pred_region
        %s1311 = ssub.s32 %s11, 2
        // Predicated region
        $region37: #{tpu_custom_call.1} parent=35 // pred_check
          %p1312 = pneg %p87
        $region38: #{tpu_custom_call.1} parent=35 // pred_check_branch
          %1314 = sbr.rel (%p1312) target = $region40
        $region39: #{tpu_custom_call.1} parent=35 // pred_region
          %s1315 = sand.u32 %s72, 1
          %s1316 = scalar_lea.sflag [#allocation3], %s1315
          %s1317 = sand.u32 %s72, 1
          %s1318 = smul.addr %s1317, 8
          %s1319 = scalar_lea.vmem [#allocation2], %s1318
          %1320 = dma.done %s1316, 128
        $region40: #{tpu_custom_call.1} parent=35 // pred_fallthru
          _
      $region36: #{tpu_custom_call.1} parent=5 // pred_fallthru
        _
    $region6: #{tpu_custom_call.1} parent=1 // loop_footer
      %s15 = sadd.s32 1, %s11
    $region7: #{tpu_custom_call.1} parent=1 // loop_footer_branch
      %10 = sbr.rel target = $region3
    $region8: #{tpu_custom_call.1} parent=1 // loop_exit
      _
    %1321 = vsyncpa [#allocation3], 1
    %s1322 = scalar_lea.sflag [#allocation3], 1
    %1323 = vsyncpa %s1322, 1

</llo_original>
